<compile_context>
chip_gen: v5e
topology: v5e:2x2
jax: 0.10.0
libtpu: 0.0.40
codegen_flags: <defaults>
</compile_context>

<pallas_src>
import jax
import jax.numpy as jnp
from jax.experimental import pallas as pl
from jax.experimental.pallas import tpu as pltpu


# ----------------------------------------------------------------------------
# Parameter slab layout (static, host-side): all weights/biases in one
# (rows x 128) f32 array with 8-aligned row offsets for cheap static slices.
# ----------------------------------------------------------------------------
def slab_layout(obs_size, H, H2, A):
    def rup8(n):
        return ((n + 7) // 8) * 8

    sections = (
        ("w_ih", obs_size),      # (OBS, 3H)  cols [0, 3H)   gate order r,z,n
        ("w_hh_rz", H),          # (H, 2H)    cols [0, 2H)   [W_hr | W_hz] (transposed)
        ("w_hh_n", H),           # (H, H)     cols [0, H)
        ("b_row", 1),            # (1, 4H)    [b_ir+b_hr | b_iz+b_hz | b_in | b_hn]
        ("w_fnn", H2),           # (H2, H)
        ("w_heads", A + 1),      # (A+1, H2)  [W_actor ; W_critic]
        ("b_fnn", H2),           # (H2, 1)    col 0
        ("b_heads", A + 1),      # (A+1, 1)   col 0
    )
    offs, r = {}, 0
    for name, nrows in sections:
        offs[name] = r
        r += rup8(nrows)
    width = max(128, ((4 * H + 127) // 128) * 128, ((H2 + 127) // 128) * 128)
    return offs, r, width


def pack_params(raw, obs_size, hidden_size, hidden_size_2, action_size):
    """Pack PyTorch-layout params into the kernel's single fused slab."""
    H, H2, A, OBS = hidden_size, hidden_size_2, action_size, obs_size
    offs, total_rows, width = slab_layout(OBS, H, H2, A)
    slab = jnp.zeros((total_rows, width), jnp.float32)

    w_ih = raw["gru.weight_ih_l0"]          # (3H, OBS)
    w_hh = raw["gru.weight_hh_l0"]          # (3H, H)
    b_ih = raw["gru.bias_ih_l0"]
    b_hh = raw["gru.bias_hh_l0"]

    slab = slab.at[offs["w_ih"]:offs["w_ih"] + OBS, 0:3 * H].set(w_ih.T)
    w_hh_rz = jnp.concatenate([w_hh[0:H].T, w_hh[H:2 * H].T], axis=1)       # (H, 2H)
    slab = slab.at[offs["w_hh_rz"]:offs["w_hh_rz"] + H, 0:2 * H].set(w_hh_rz)
    slab = slab.at[offs["w_hh_n"]:offs["w_hh_n"] + H, 0:H].set(w_hh[2 * H:3 * H].T)

    b_row = jnp.concatenate([
        b_ih[0:2 * H] + b_hh[0:2 * H],      # r, z biases pre-folded
        b_ih[2 * H:3 * H],                  # b_in
        b_hh[2 * H:3 * H],                  # b_hn (stays under r * (.))
    ])
    slab = slab.at[offs["b_row"]:offs["b_row"] + 1, 0:4 * H].set(b_row.reshape(1, 4 * H))

    slab = slab.at[offs["w_fnn"]:offs["w_fnn"] + H2, 0:H].set(raw["fnn.weight"])
    w_heads = jnp.concatenate([raw["actor.weight"], raw["critic.weight"]], axis=0)
    slab = slab.at[offs["w_heads"]:offs["w_heads"] + A + 1, 0:H2].set(w_heads)

    slab = slab.at[offs["b_fnn"]:offs["b_fnn"] + H2, 0].set(raw["fnn.bias"])
    b_heads = jnp.concatenate([raw["actor.bias"], raw["critic.bias"]])
    slab = slab.at[offs["b_heads"]:offs["b_heads"] + A + 1, 0].set(b_heads)
    return slab


# ----------------------------------------------------------------------------
# Kernel
# ----------------------------------------------------------------------------
def make_kernel(OBS, H, H2, A, B, T, offs):
    N = B * T

    def kernel(
        obs_ref,    # (T*B, OBS)        f32  time-major rows (n = t*B + b)
        h0_ref,     # (B, H)            f32
        gum_ref,    # (A, T*B)          f32  Gumbel noise, time-major lanes
        par_ref,    # (rows, 128)       f32  packed parameter slab
        out_ref,    # (3, T*B)          f32  out: [action | value | log_prob]
        hn_ref,     # (B, H)            f32  out: final hidden state
        gi_scr,     # (T*B, 3H)         f32  scratch: hoisted input projection
        g_scr,      # (T*B, H)          f32  scratch: GRU outputs
    ):
        o = offs
        # ---- one-time parameter loads (static 8-aligned row slices) ----
        w_ih = par_ref[o["w_ih"]:o["w_ih"] + OBS, 0:3 * H]
        w_hh_rz = par_ref[o["w_hh_rz"]:o["w_hh_rz"] + H, 0:2 * H]
        w_hh_n = par_ref[o["w_hh_n"]:o["w_hh_n"] + H, 0:H]
        b_row = par_ref[o["b_row"]:o["b_row"] + 1, 0:4 * H]
        b_gi = b_row[:, 0:3 * H]                  # (1, 3H)
        b_hn = b_row[:, 3 * H:4 * H]              # (1, H)

        # ---- hoisted input projection -> VMEM scratch (bounds vreg pressure) ----
        gi_scr[...] = jnp.dot(obs_ref[...], w_ih,
                              preferred_element_type=jnp.float32) + b_gi   # (N, 3H)

        # ---- fully unrolled GRU recurrence (PyTorch nn.GRU semantics) ----
        # r/z hidden matmuls fused into one (B,H)@(H,2H); per-step gate inputs
        # re-loaded from scratch so the live set stays one step's working set.
        h = h0_ref[...]
        for t in range(T):                         # T static -> full unroll
            lo = t * B
            gi_rz = gi_scr[lo:lo + B, 0:2 * H]     # (B, 2H)
            gi_n = gi_scr[lo:lo + B, 2 * H:3 * H]  # (B, H)
            h_rz = jnp.dot(h, w_hh_rz, preferred_element_type=jnp.float32)
            rz = jax.nn.sigmoid(gi_rz + h_rz)
            r = rz[:, 0:H]
            z = rz[:, H:2 * H]
            h_n = jnp.dot(h, w_hh_n, preferred_element_type=jnp.float32) + b_hn
            n = jnp.tanh(gi_n + r * h_n)
            h = (1.0 - z) * n + z * h
            g_scr[lo:lo + B, :] = h                # off-chain store (vst slot)
        hn_ref[...] = h

        # ---- FNN + fused actor/critic heads, transposed (lane-major) form ----
        w_fnn = par_ref[o["w_fnn"]:o["w_fnn"] + H2, 0:H]
        w_heads = par_ref[o["w_heads"]:o["w_heads"] + A + 1, 0:H2]
        b_f = par_ref[o["b_fnn"]:o["b_fnn"] + H2, 0:1]                # (H2, 1)
        b_h = par_ref[o["b_heads"]:o["b_heads"] + A + 1, 0:1]         # (A+1, 1)

        g = g_scr[...]                                                # (N, H)
        # fT[o, n] = sum_h w_fnn[o, h] * g[n, h]
        fT = jax.lax.dot_general(w_fnn, g, (((1,), (1,)), ((), ())),
                                 preferred_element_type=jnp.float32) + b_f
        fT = jnp.maximum(fT, 0.0)                                     # (H2, N)
        headsT = jnp.dot(w_heads, fT,
                         preferred_element_type=jnp.float32) + b_h    # (A+1, N)
        logitsT = headsT[0:A, :]                                      # (A, N)
        valueT = headsT[A:A + 1, :]                                   # (1, N)

        # ---- Categorical sample (Gumbel-max) + log_prob, lane-dense ----
        pert = logitsT + gum_ref[...]
        rows = jax.lax.broadcasted_iota(jnp.int32, (A, N), 0)
        m = jnp.max(pert, axis=0, keepdims=True)
        act_i = jnp.min(jnp.where(pert >= m, rows, A), axis=0, keepdims=True)  # (1,N)

        lmax = jnp.max(logitsT, axis=0, keepdims=True)
        lse = jnp.log(jnp.sum(jnp.exp(logitsT - lmax), axis=0, keepdims=True)) + lmax
        log_sm = logitsT - lse
        onehot = (rows == act_i).astype(jnp.float32)
        logprobT = jnp.sum(log_sm * onehot, axis=0, keepdims=True)              # (1,N)

        out_ref[...] = jnp.concatenate(
            [act_i.astype(jnp.float32), valueT, logprobT], axis=0)              # (3,N)

    return kernel


# ----------------------------------------------------------------------------
# Wrapper
# ----------------------------------------------------------------------------
def gru_policy_forward(obs, hidden_memory, slab, gumbel, *,
                       hidden_size_2, action_size):
    """obs: (B, T, obs_size) batch_first.  hidden_memory: (1, B, H).
    gumbel: (B*T, A) in PyTorch flatten order.
    Returns (action (B*T,), value (B*T,1), log_prob (B*T,), new_hidden (1,B,H))."""
    B, T, OBS = obs.shape
    H = hidden_memory.shape[-1]
    H2, A = hidden_size_2, action_size
    N = B * T
    offs, slab_rows, slab_width = slab_layout(OBS, H, H2, A)
    assert slab.shape == (slab_rows, slab_width)

    # wrapper-side layout plumbing (keeps the kernel transpose-free)
    obs_tm = jnp.transpose(obs, (1, 0, 2)).reshape(N, OBS)              # n = t*B + b
    h0 = hidden_memory.reshape(B, H)
    gum_tm = jnp.transpose(gumbel.reshape(B, T, A), (2, 1, 0)).reshape(A, N)

    flops = (2 * N * OBS * 3 * H
             + T * (2 * B * H * 2 * H + 2 * B * H * H)
             + 2 * H2 * N * H
             + 2 * (A + 1) * N * H2
             + 16 * N * H)
    transcendentals = T * B * 3 * H + N * (A + 2)
    bytes_accessed = 4 * (N * OBS + B * H + A * N
                          + slab_rows * slab_width + 3 * N + B * H)

    vmem = pl.BlockSpec(memory_space=pltpu.MemorySpace.VMEM)
    out_tm, h_n = pl.pallas_call(
        make_kernel(OBS, H, H2, A, B, T, offs),
        out_shape=(
            jax.ShapeDtypeStruct((3, N), jnp.float32),
            jax.ShapeDtypeStruct((B, H), jnp.float32),
        ),
        in_specs=[vmem] * 4,
        out_specs=(vmem, vmem),
        scratch_shapes=[
            pltpu.VMEM((N, 3 * H), jnp.float32),    # gi_scr
            pltpu.VMEM((N, H), jnp.float32),        # g_scr
        ],
        cost_estimate=pl.CostEstimate(
            flops=flops, transcendentals=transcendentals,
            bytes_accessed=bytes_accessed),
    )(obs_tm, h0, gum_tm, slab)

    # back to PyTorch's out.flatten(end_dim=1) (batch-major) row order
    def to_bm(x_tm):                                 # time-major -> batch-major
        return x_tm.reshape(T, B).T.reshape(N)

    action = to_bm(out_tm[0]).astype(jnp.int32)
    value = to_bm(out_tm[1]).reshape(N, 1)
    log_prob = to_bm(out_tm[2])
    return action, value, log_prob, h_n.reshape(1, B, H)


# ----------------------------------------------------------------------------
# PyTorch-style init + pure-JAX reference (for the correctness check)
# ----------------------------------------------------------------------------
def init_torch_style_params(key, obs_size, hidden_size, hidden_size_2, action_size):
    def unif(k, shape, fan):
        bound = 1.0 / jnp.sqrt(jnp.asarray(fan, jnp.float32))
        return jax.random.uniform(k, shape, jnp.float32, -bound, bound)

    H, H2, A = hidden_size, hidden_size_2, action_size
    ks = jax.random.split(key, 10)
    return {
        "gru.weight_ih_l0": unif(ks[0], (3 * H, obs_size), H),   # gate order r,z,n
        "gru.weight_hh_l0": unif(ks[1], (3 * H, H), H),
        "gru.bias_ih_l0": unif(ks[2], (3 * H,), H),
        "gru.bias_hh_l0": unif(ks[3], (3 * H,), H),
        "fnn.weight": unif(ks[4], (H2, H), H),
        "fnn.bias": unif(ks[5], (H2,), H),
        "actor.weight": unif(ks[6], (A, H2), H2),
        "actor.bias": unif(ks[7], (A,), H2),
        "critic.weight": unif(ks[8], (1, H2), H2),
        "critic.bias": unif(ks[9], (1,), H2),
    }


def reference_forward(obs, hidden_memory, raw, gumbel):
    """Pure-JAX reference of the PyTorch module (discrete branch)."""
    B, T, _ = obs.shape
    H = hidden_memory.shape[-1]
    hp = jax.lax.Precision.HIGHEST
    w_ih, w_hh = raw["gru.weight_ih_l0"], raw["gru.weight_hh_l0"]
    b_ih, b_hh = raw["gru.bias_ih_l0"], raw["gru.bias_hh_l0"]
    h = hidden_memory[0]
    outs = []
    for t in range(T):
        x = obs[:, t, :]
        gi = jnp.dot(x, w_ih.T, precision=hp) + b_ih
        gh = jnp.dot(h, w_hh.T, precision=hp) + b_hh
        i_r, i_z, i_n = gi[:, :H], gi[:, H:2 * H], gi[:, 2 * H:]
        h_r, h_z, h_n = gh[:, :H], gh[:, H:2 * H], gh[:, 2 * H:]
        r = jax.nn.sigmoid(i_r + h_r)
        z = jax.nn.sigmoid(i_z + h_z)
        n = jnp.tanh(i_n + r * h_n)
        h = (1.0 - z) * n + z * h
        outs.append(h)
    out = jnp.stack(outs, axis=1).reshape(B * T, H)       # batch-major flatten
    f = jax.nn.relu(jnp.dot(out, raw["fnn.weight"].T, precision=hp) + raw["fnn.bias"])
    logits = jnp.dot(f, raw["actor.weight"].T, precision=hp) + raw["actor.bias"]
    value = jnp.dot(f, raw["critic.weight"].T, precision=hp) + raw["critic.bias"]
    log_sm = jax.nn.log_softmax(logits, axis=-1)
    action = jnp.argmax(logits + gumbel, axis=-1)
    return action, value, log_sm, h.reshape(1, B, H)


if __name__ == "__main__":
    # num_workers (batch) = 8, seq = 8, obs = 16, hidden = 32, hidden_2 = 32, actions = 4
    B, T, OBS, H, H2, A = 8, 8, 16, 32, 32, 4

    key = jax.random.PRNGKey(0)
    k_param, k_obs, k_noise = jax.random.split(key, 3)

    raw = init_torch_style_params(k_param, OBS, H, H2, A)
    slab = pack_params(raw, OBS, H, H2, A)

    obs = jax.random.normal(k_obs, (B, T, OBS), jnp.float32)
    hidden_memory = jnp.zeros((1, B, H), jnp.float32)      # self.hidden_memory

    # Gumbel noise for Categorical sampling (Gumbel-max trick), PyTorch flatten order.
    u = jax.random.uniform(k_noise, (B * T, A), jnp.float32, 1e-6, 1.0 - 1e-6)
    gumbel = -jnp.log(-jnp.log(u))

    fwd = jax.jit(gru_policy_forward,
                  static_argnames=("hidden_size_2", "action_size"))
    action, value, log_prob, new_hidden = fwd(
        obs, hidden_memory, slab, gumbel, hidden_size_2=H2, action_size=A)
    jax.block_until_ready((action, value, log_prob, new_hidden))

    # shape contract matching the PyTorch module's forward()
    assert action.shape == (B * T,) and action.dtype == jnp.int32
    assert value.shape == (B * T, 1)
    assert log_prob.shape == (B * T,)
    assert new_hidden.shape == (1, B, H)

    # numerical check against the pure-JAX reference
    ref_action, ref_value, ref_log_sm, ref_hidden = reference_forward(
        obs, hidden_memory, raw, gumbel)
    assert bool(jnp.all((action >= 0) & (action < A)))
    assert jnp.allclose(value, ref_value, atol=2e-3, rtol=2e-3)
    assert jnp.allclose(new_hidden, ref_hidden, atol=2e-3, rtol=2e-3)
    # log_prob must equal the reference log-softmax at the sampled action
    ref_lp_at_act = jnp.take_along_axis(ref_log_sm, action[:, None], axis=-1)[:, 0]
    assert jnp.allclose(log_prob, ref_lp_at_act, atol=2e-3, rtol=2e-3)
    # sampled actions agree with the reference Gumbel-max (allow rare float ties)
    assert float(jnp.mean((action == ref_action).astype(jnp.float32))) > 0.9

    print("KERNEL_OK")
</pallas_src>

<mosaic_0001>
module attributes {stable_mosaic.version = 11 : i64} {
  func.func @kernel(%arg0: memref<64x16xf32, #tpu.memory_space<vmem>>, %arg1: memref<8x32xf32, #tpu.memory_space<vmem>>, %arg2: memref<4x64xf32, #tpu.memory_space<vmem>>, %arg3: memref<168x128xf32, #tpu.memory_space<vmem>>, %arg4: memref<3x64xf32, #tpu.memory_space<vmem>>, %arg5: memref<8x32xf32, #tpu.memory_space<vmem>>, %arg6: memref<64x96xf32, #tpu.memory_space<vmem>>, %arg7: memref<64x32xf32, #tpu.memory_space<vmem>>) attributes {dimension_semantics = [], scalar_prefetch = 0 : i64, scratch_operands = 2 : i64, tpu.core_type = #tpu.core_type<tc>} {
    %c0 = arith.constant 0 : index
    %c0_0 = arith.constant 0 : index
    %0 = vector.load %arg3[%c0, %c0_0] : memref<168x128xf32, #tpu.memory_space<vmem>>, vector<16x96xf32>
    %c16 = arith.constant 16 : index
    %c0_1 = arith.constant 0 : index
    %1 = vector.load %arg3[%c16, %c0_1] : memref<168x128xf32, #tpu.memory_space<vmem>>, vector<32x64xf32>
    %c48 = arith.constant 48 : index
    %c0_2 = arith.constant 0 : index
    %2 = vector.load %arg3[%c48, %c0_2] : memref<168x128xf32, #tpu.memory_space<vmem>>, vector<32x32xf32>
    %c80 = arith.constant 80 : index
    %c0_3 = arith.constant 0 : index
    %3 = vector.load %arg3[%c80, %c0_3] : memref<168x128xf32, #tpu.memory_space<vmem>>, vector<1x128xf32>
    %4 = vector.extract_strided_slice %3 {offsets = [0, 0], sizes = [1, 96], strides = [1, 1]} : vector<1x128xf32> to vector<1x96xf32>
    %5 = vector.extract_strided_slice %3 {offsets = [0, 96], sizes = [1, 32], strides = [1, 1]} : vector<1x128xf32> to vector<1x32xf32>
    %c0_4 = arith.constant 0 : index
    %c0_5 = arith.constant 0 : index
    %6 = vector.load %arg0[%c0_4, %c0_5] : memref<64x16xf32, #tpu.memory_space<vmem>>, vector<64x16xf32>
    %cst = arith.constant dense<0.000000e+00> : vector<64x96xf32>
    %7 = tpu.matmul %6, %0, %cst {dimension_numbers = #tpu.dot_dimension_numbers<[1], [0], [0], [1], [0, 0, 1, 1], [], []>} : vector<64x16xf32>, vector<16x96xf32>, vector<64x96xf32> -> vector<64x96xf32>
    %8 = vector.broadcast %4 : vector<1x96xf32> to vector<64x96xf32>
    %9 = arith.addf %7, %8 : vector<64x96xf32>
    %c0_6 = arith.constant 0 : index
    %c0_7 = arith.constant 0 : index
    %10 = vector.load %arg6[%c0_6, %c0_7] : memref<64x96xf32, #tpu.memory_space<vmem>>, vector<64x96xf32>
    tpu.vector_store %arg6[%c0_6, %c0_7], %9 {strides = array<i32>} : memref<64x96xf32, #tpu.memory_space<vmem>>, vector<64x96xf32>,
    %c0_8 = arith.constant 0 : index
    %c0_9 = arith.constant 0 : index
    %11 = vector.load %arg1[%c0_8, %c0_9] : memref<8x32xf32, #tpu.memory_space<vmem>>, vector<8x32xf32>
    %c0_10 = arith.constant 0 : index
    %c0_11 = arith.constant 0 : index
    %12 = vector.load %arg6[%c0_10, %c0_11] : memref<64x96xf32, #tpu.memory_space<vmem>>, vector<8x64xf32>
    %c0_12 = arith.constant 0 : index
    %c64 = arith.constant 64 : index
    %13 = vector.load %arg6[%c0_12, %c64] : memref<64x96xf32, #tpu.memory_space<vmem>>, vector<8x32xf32>
    %cst_13 = arith.constant dense<0.000000e+00> : vector<8x64xf32>
    %14 = tpu.matmul %11, %1, %cst_13 {dimension_numbers = #tpu.dot_dimension_numbers<[1], [0], [0], [1], [0, 0, 1, 1], [], []>} : vector<8x32xf32>, vector<32x64xf32>, vector<8x64xf32> -> vector<8x64xf32>
    %15 = arith.addf %12, %14 : vector<8x64xf32>
    %16 = arith.negf %15 : vector<8x64xf32>
    %17 = math.exp %16 : vector<8x64xf32>
    %cst_14 = arith.constant 1.000000e+00 : f32
    %18 = vector.broadcast %cst_14 : f32 to vector<8x64xf32>
    %19 = arith.addf %18, %17 : vector<8x64xf32>
    %20 = arith.divf %18, %19 : vector<8x64xf32>
    %21 = vector.extract_strided_slice %20 {offsets = [0, 0], sizes = [8, 32], strides = [1, 1]} : vector<8x64xf32> to vector<8x32xf32>
    %22 = vector.extract_strided_slice %20 {offsets = [0, 32], sizes = [8, 32], strides = [1, 1]} : vector<8x64xf32> to vector<8x32xf32>
    %cst_15 = arith.constant dense<0.000000e+00> : vector<8x32xf32>
    %23 = tpu.matmul %11, %2, %cst_15 {dimension_numbers = #tpu.dot_dimension_numbers<[1], [0], [0], [1], [0, 0, 1, 1], [], []>} : vector<8x32xf32>, vector<32x32xf32>, vector<8x32xf32> -> vector<8x32xf32>
    %24 = vector.broadcast %5 : vector<1x32xf32> to vector<8x32xf32>
    %25 = arith.addf %23, %24 : vector<8x32xf32>
    %26 = arith.mulf %21, %25 : vector<8x32xf32>
    %27 = arith.addf %13, %26 : vector<8x32xf32>
    %28 = math.tanh %27 : vector<8x32xf32>
    %cst_16 = arith.constant 1.000000e+00 : f32
    %29 = vector.broadcast %cst_16 : f32 to vector<8x32xf32>
    %30 = arith.subf %29, %22 : vector<8x32xf32>
    %31 = arith.mulf %30, %28 : vector<8x32xf32>
    %32 = arith.mulf %22, %11 : vector<8x32xf32>
    %33 = arith.addf %31, %32 : vector<8x32xf32>
    %c0_17 = arith.constant 0 : index
    %c0_18 = arith.constant 0 : index
    %34 = vector.load %arg7[%c0_17, %c0_18] : memref<64x32xf32, #tpu.memory_space<vmem>>, vector<8x32xf32>
    tpu.vector_store %arg7[%c0_17, %c0_18], %33 {strides = array<i32>} : memref<64x32xf32, #tpu.memory_space<vmem>>, vector<8x32xf32>,
    %c8 = arith.constant 8 : index
    %c0_19 = arith.constant 0 : index
    %35 = vector.load %arg6[%c8, %c0_19] : memref<64x96xf32, #tpu.memory_space<vmem>>, vector<8x64xf32>
    %c8_20 = arith.constant 8 : index
    %c64_21 = arith.constant 64 : index
    %36 = vector.load %arg6[%c8_20, %c64_21] : memref<64x96xf32, #tpu.memory_space<vmem>>, vector<8x32xf32>
    %cst_22 = arith.constant dense<0.000000e+00> : vector<8x64xf32>
    %37 = tpu.matmul %33, %1, %cst_22 {dimension_numbers = #tpu.dot_dimension_numbers<[1], [0], [0], [1], [0, 0, 1, 1], [], []>} : vector<8x32xf32>, vector<32x64xf32>, vector<8x64xf32> -> vector<8x64xf32>
    %38 = arith.addf %35, %37 : vector<8x64xf32>
    %39 = arith.negf %38 : vector<8x64xf32>
    %40 = math.exp %39 : vector<8x64xf32>
    %cst_23 = arith.constant 1.000000e+00 : f32
    %41 = vector.broadcast %cst_23 : f32 to vector<8x64xf32>
    %42 = arith.addf %41, %40 : vector<8x64xf32>
    %43 = arith.divf %41, %42 : vector<8x64xf32>
    %44 = vector.extract_strided_slice %43 {offsets = [0, 0], sizes = [8, 32], strides = [1, 1]} : vector<8x64xf32> to vector<8x32xf32>
    %45 = vector.extract_strided_slice %43 {offsets = [0, 32], sizes = [8, 32], strides = [1, 1]} : vector<8x64xf32> to vector<8x32xf32>
    %cst_24 = arith.constant dense<0.000000e+00> : vector<8x32xf32>
    %46 = tpu.matmul %33, %2, %cst_24 {dimension_numbers = #tpu.dot_dimension_numbers<[1], [0], [0], [1], [0, 0, 1, 1], [], []>} : vector<8x32xf32>, vector<32x32xf32>, vector<8x32xf32> -> vector<8x32xf32>
    %47 = vector.broadcast %5 : vector<1x32xf32> to vector<8x32xf32>
    %48 = arith.addf %46, %47 : vector<8x32xf32>
    %49 = arith.mulf %44, %48 : vector<8x32xf32>
    %50 = arith.addf %36, %49 : vector<8x32xf32>
    %51 = math.tanh %50 : vector<8x32xf32>
    %cst_25 = arith.constant 1.000000e+00 : f32
    %52 = vector.broadcast %cst_25 : f32 to vector<8x32xf32>
    %53 = arith.subf %52, %45 : vector<8x32xf32>
    %54 = arith.mulf %53, %51 : vector<8x32xf32>
    %55 = arith.mulf %45, %33 : vector<8x32xf32>
    %56 = arith.addf %54, %55 : vector<8x32xf32>
    %c8_26 = arith.constant 8 : index
    %c0_27 = arith.constant 0 : index
    %57 = vector.load %arg7[%c8_26, %c0_27] : memref<64x32xf32, #tpu.memory_space<vmem>>, vector<8x32xf32>
    tpu.vector_store %arg7[%c8_26, %c0_27], %56 {strides = array<i32>} : memref<64x32xf32, #tpu.memory_space<vmem>>, vector<8x32xf32>,
    %c16_28 = arith.constant 16 : index
    %c0_29 = arith.constant 0 : index
    %58 = vector.load %arg6[%c16_28, %c0_29] : memref<64x96xf32, #tpu.memory_space<vmem>>, vector<8x64xf32>
    %c16_30 = arith.constant 16 : index
    %c64_31 = arith.constant 64 : index
    %59 = vector.load %arg6[%c16_30, %c64_31] : memref<64x96xf32, #tpu.memory_space<vmem>>, vector<8x32xf32>
    %cst_32 = arith.constant dense<0.000000e+00> : vector<8x64xf32>
    %60 = tpu.matmul %56, %1, %cst_32 {dimension_numbers = #tpu.dot_dimension_numbers<[1], [0], [0], [1], [0, 0, 1, 1], [], []>} : vector<8x32xf32>, vector<32x64xf32>, vector<8x64xf32> -> vector<8x64xf32>
    %61 = arith.addf %58, %60 : vector<8x64xf32>
    %62 = arith.negf %61 : vector<8x64xf32>
    %63 = math.exp %62 : vector<8x64xf32>
    %cst_33 = arith.constant 1.000000e+00 : f32
    %64 = vector.broadcast %cst_33 : f32 to vector<8x64xf32>
    %65 = arith.addf %64, %63 : vector<8x64xf32>
    %66 = arith.divf %64, %65 : vector<8x64xf32>
    %67 = vector.extract_strided_slice %66 {offsets = [0, 0], sizes = [8, 32], strides = [1, 1]} : vector<8x64xf32> to vector<8x32xf32>
    %68 = vector.extract_strided_slice %66 {offsets = [0, 32], sizes = [8, 32], strides = [1, 1]} : vector<8x64xf32> to vector<8x32xf32>
    %cst_34 = arith.constant dense<0.000000e+00> : vector<8x32xf32>
    %69 = tpu.matmul %56, %2, %cst_34 {dimension_numbers = #tpu.dot_dimension_numbers<[1], [0], [0], [1], [0, 0, 1, 1], [], []>} : vector<8x32xf32>, vector<32x32xf32>, vector<8x32xf32> -> vector<8x32xf32>
    %70 = vector.broadcast %5 : vector<1x32xf32> to vector<8x32xf32>
    %71 = arith.addf %69, %70 : vector<8x32xf32>
    %72 = arith.mulf %67, %71 : vector<8x32xf32>
    %73 = arith.addf %59, %72 : vector<8x32xf32>
    %74 = math.tanh %73 : vector<8x32xf32>
    %cst_35 = arith.constant 1.000000e+00 : f32
    %75 = vector.broadcast %cst_35 : f32 to vector<8x32xf32>
    %76 = arith.subf %75, %68 : vector<8x32xf32>
    %77 = arith.mulf %76, %74 : vector<8x32xf32>
    %78 = arith.mulf %68, %56 : vector<8x32xf32>
    %79 = arith.addf %77, %78 : vector<8x32xf32>
    %c16_36 = arith.constant 16 : index
    %c0_37 = arith.constant 0 : index
    %80 = vector.load %arg7[%c16_36, %c0_37] : memref<64x32xf32, #tpu.memory_space<vmem>>, vector<8x32xf32>
    tpu.vector_store %arg7[%c16_36, %c0_37], %79 {strides = array<i32>} : memref<64x32xf32, #tpu.memory_space<vmem>>, vector<8x32xf32>,
    %c24 = arith.constant 24 : index
    %c0_38 = arith.constant 0 : index
    %81 = vector.load %arg6[%c24, %c0_38] : memref<64x96xf32, #tpu.memory_space<vmem>>, vector<8x64xf32>
    %c24_39 = arith.constant 24 : index
    %c64_40 = arith.constant 64 : index
    %82 = vector.load %arg6[%c24_39, %c64_40] : memref<64x96xf32, #tpu.memory_space<vmem>>, vector<8x32xf32>
    %cst_41 = arith.constant dense<0.000000e+00> : vector<8x64xf32>
    %83 = tpu.matmul %79, %1, %cst_41 {dimension_numbers = #tpu.dot_dimension_numbers<[1], [0], [0], [1], [0, 0, 1, 1], [], []>} : vector<8x32xf32>, vector<32x64xf32>, vector<8x64xf32> -> vector<8x64xf32>
    %84 = arith.addf %81, %83 : vector<8x64xf32>
    %85 = arith.negf %84 : vector<8x64xf32>
    %86 = math.exp %85 : vector<8x64xf32>
    %cst_42 = arith.constant 1.000000e+00 : f32
    %87 = vector.broadcast %cst_42 : f32 to vector<8x64xf32>
    %88 = arith.addf %87, %86 : vector<8x64xf32>
    %89 = arith.divf %87, %88 : vector<8x64xf32>
    %90 = vector.extract_strided_slice %89 {offsets = [0, 0], sizes = [8, 32], strides = [1, 1]} : vector<8x64xf32> to vector<8x32xf32>
    %91 = vector.extract_strided_slice %89 {offsets = [0, 32], sizes = [8, 32], strides = [1, 1]} : vector<8x64xf32> to vector<8x32xf32>
    %cst_43 = arith.constant dense<0.000000e+00> : vector<8x32xf32>
    %92 = tpu.matmul %79, %2, %cst_43 {dimension_numbers = #tpu.dot_dimension_numbers<[1], [0], [0], [1], [0, 0, 1, 1], [], []>} : vector<8x32xf32>, vector<32x32xf32>, vector<8x32xf32> -> vector<8x32xf32>
    %93 = vector.broadcast %5 : vector<1x32xf32> to vector<8x32xf32>
    %94 = arith.addf %92, %93 : vector<8x32xf32>
    %95 = arith.mulf %90, %94 : vector<8x32xf32>
    %96 = arith.addf %82, %95 : vector<8x32xf32>
    %97 = math.tanh %96 : vector<8x32xf32>
    %cst_44 = arith.constant 1.000000e+00 : f32
    %98 = vector.broadcast %cst_44 : f32 to vector<8x32xf32>
    %99 = arith.subf %98, %91 : vector<8x32xf32>
    %100 = arith.mulf %99, %97 : vector<8x32xf32>
    %101 = arith.mulf %91, %79 : vector<8x32xf32>
    %102 = arith.addf %100, %101 : vector<8x32xf32>
    %c24_45 = arith.constant 24 : index
    %c0_46 = arith.constant 0 : index
    %103 = vector.load %arg7[%c24_45, %c0_46] : memref<64x32xf32, #tpu.memory_space<vmem>>, vector<8x32xf32>
    tpu.vector_store %arg7[%c24_45, %c0_46], %102 {strides = array<i32>} : memref<64x32xf32, #tpu.memory_space<vmem>>, vector<8x32xf32>,
    %c32 = arith.constant 32 : index
    %c0_47 = arith.constant 0 : index
    %104 = vector.load %arg6[%c32, %c0_47] : memref<64x96xf32, #tpu.memory_space<vmem>>, vector<8x64xf32>
    %c32_48 = arith.constant 32 : index
    %c64_49 = arith.constant 64 : index
    %105 = vector.load %arg6[%c32_48, %c64_49] : memref<64x96xf32, #tpu.memory_space<vmem>>, vector<8x32xf32>
    %cst_50 = arith.constant dense<0.000000e+00> : vector<8x64xf32>
    %106 = tpu.matmul %102, %1, %cst_50 {dimension_numbers = #tpu.dot_dimension_numbers<[1], [0], [0], [1], [0, 0, 1, 1], [], []>} : vector<8x32xf32>, vector<32x64xf32>, vector<8x64xf32> -> vector<8x64xf32>
    %107 = arith.addf %104, %106 : vector<8x64xf32>
    %108 = arith.negf %107 : vector<8x64xf32>
    %109 = math.exp %108 : vector<8x64xf32>
    %cst_51 = arith.constant 1.000000e+00 : f32
    %110 = vector.broadcast %cst_51 : f32 to vector<8x64xf32>
    %111 = arith.addf %110, %109 : vector<8x64xf32>
    %112 = arith.divf %110, %111 : vector<8x64xf32>
    %113 = vector.extract_strided_slice %112 {offsets = [0, 0], sizes = [8, 32], strides = [1, 1]} : vector<8x64xf32> to vector<8x32xf32>
    %114 = vector.extract_strided_slice %112 {offsets = [0, 32], sizes = [8, 32], strides = [1, 1]} : vector<8x64xf32> to vector<8x32xf32>
    %cst_52 = arith.constant dense<0.000000e+00> : vector<8x32xf32>
    %115 = tpu.matmul %102, %2, %cst_52 {dimension_numbers = #tpu.dot_dimension_numbers<[1], [0], [0], [1], [0, 0, 1, 1], [], []>} : vector<8x32xf32>, vector<32x32xf32>, vector<8x32xf32> -> vector<8x32xf32>
    %116 = vector.broadcast %5 : vector<1x32xf32> to vector<8x32xf32>
    %117 = arith.addf %115, %116 : vector<8x32xf32>
    %118 = arith.mulf %113, %117 : vector<8x32xf32>
    %119 = arith.addf %105, %118 : vector<8x32xf32>
    %120 = math.tanh %119 : vector<8x32xf32>
    %cst_53 = arith.constant 1.000000e+00 : f32
    %121 = vector.broadcast %cst_53 : f32 to vector<8x32xf32>
    %122 = arith.subf %121, %114 : vector<8x32xf32>
    %123 = arith.mulf %122, %120 : vector<8x32xf32>
    %124 = arith.mulf %114, %102 : vector<8x32xf32>
    %125 = arith.addf %123, %124 : vector<8x32xf32>
    %c32_54 = arith.constant 32 : index
    %c0_55 = arith.constant 0 : index
    %126 = vector.load %arg7[%c32_54, %c0_55] : memref<64x32xf32, #tpu.memory_space<vmem>>, vector<8x32xf32>
    tpu.vector_store %arg7[%c32_54, %c0_55], %125 {strides = array<i32>} : memref<64x32xf32, #tpu.memory_space<vmem>>, vector<8x32xf32>,
    %c40 = arith.constant 40 : index
    %c0_56 = arith.constant 0 : index
    %127 = vector.load %arg6[%c40, %c0_56] : memref<64x96xf32, #tpu.memory_space<vmem>>, vector<8x64xf32>
    %c40_57 = arith.constant 40 : index
    %c64_58 = arith.constant 64 : index
    %128 = vector.load %arg6[%c40_57, %c64_58] : memref<64x96xf32, #tpu.memory_space<vmem>>, vector<8x32xf32>
    %cst_59 = arith.constant dense<0.000000e+00> : vector<8x64xf32>
    %129 = tpu.matmul %125, %1, %cst_59 {dimension_numbers = #tpu.dot_dimension_numbers<[1], [0], [0], [1], [0, 0, 1, 1], [], []>} : vector<8x32xf32>, vector<32x64xf32>, vector<8x64xf32> -> vector<8x64xf32>
    %130 = arith.addf %127, %129 : vector<8x64xf32>
    %131 = arith.negf %130 : vector<8x64xf32>
    %132 = math.exp %131 : vector<8x64xf32>
    %cst_60 = arith.constant 1.000000e+00 : f32
    %133 = vector.broadcast %cst_60 : f32 to vector<8x64xf32>
    %134 = arith.addf %133, %132 : vector<8x64xf32>
    %135 = arith.divf %133, %134 : vector<8x64xf32>
    %136 = vector.extract_strided_slice %135 {offsets = [0, 0], sizes = [8, 32], strides = [1, 1]} : vector<8x64xf32> to vector<8x32xf32>
    %137 = vector.extract_strided_slice %135 {offsets = [0, 32], sizes = [8, 32], strides = [1, 1]} : vector<8x64xf32> to vector<8x32xf32>
    %cst_61 = arith.constant dense<0.000000e+00> : vector<8x32xf32>
    %138 = tpu.matmul %125, %2, %cst_61 {dimension_numbers = #tpu.dot_dimension_numbers<[1], [0], [0], [1], [0, 0, 1, 1], [], []>} : vector<8x32xf32>, vector<32x32xf32>, vector<8x32xf32> -> vector<8x32xf32>
    %139 = vector.broadcast %5 : vector<1x32xf32> to vector<8x32xf32>
    %140 = arith.addf %138, %139 : vector<8x32xf32>
    %141 = arith.mulf %136, %140 : vector<8x32xf32>
    %142 = arith.addf %128, %141 : vector<8x32xf32>
    %143 = math.tanh %142 : vector<8x32xf32>
    %cst_62 = arith.constant 1.000000e+00 : f32
    %144 = vector.broadcast %cst_62 : f32 to vector<8x32xf32>
    %145 = arith.subf %144, %137 : vector<8x32xf32>
    %146 = arith.mulf %145, %143 : vector<8x32xf32>
    %147 = arith.mulf %137, %125 : vector<8x32xf32>
    %148 = arith.addf %146, %147 : vector<8x32xf32>
    %c40_63 = arith.constant 40 : index
    %c0_64 = arith.constant 0 : index
    %149 = vector.load %arg7[%c40_63, %c0_64] : memref<64x32xf32, #tpu.memory_space<vmem>>, vector<8x32xf32>
    tpu.vector_store %arg7[%c40_63, %c0_64], %148 {strides = array<i32>} : memref<64x32xf32, #tpu.memory_space<vmem>>, vector<8x32xf32>,
    %c48_65 = arith.constant 48 : index
    %c0_66 = arith.constant 0 : index
    %150 = vector.load %arg6[%c48_65, %c0_66] : memref<64x96xf32, #tpu.memory_space<vmem>>, vector<8x64xf32>
    %c48_67 = arith.constant 48 : index
    %c64_68 = arith.constant 64 : index
    %151 = vector.load %arg6[%c48_67, %c64_68] : memref<64x96xf32, #tpu.memory_space<vmem>>, vector<8x32xf32>
    %cst_69 = arith.constant dense<0.000000e+00> : vector<8x64xf32>
    %152 = tpu.matmul %148, %1, %cst_69 {dimension_numbers = #tpu.dot_dimension_numbers<[1], [0], [0], [1], [0, 0, 1, 1], [], []>} : vector<8x32xf32>, vector<32x64xf32>, vector<8x64xf32> -> vector<8x64xf32>
    %153 = arith.addf %150, %152 : vector<8x64xf32>
    %154 = arith.negf %153 : vector<8x64xf32>
    %155 = math.exp %154 : vector<8x64xf32>
    %cst_70 = arith.constant 1.000000e+00 : f32
    %156 = vector.broadcast %cst_70 : f32 to vector<8x64xf32>
    %157 = arith.addf %156, %155 : vector<8x64xf32>
    %158 = arith.divf %156, %157 : vector<8x64xf32>
    %159 = vector.extract_strided_slice %158 {offsets = [0, 0], sizes = [8, 32], strides = [1, 1]} : vector<8x64xf32> to vector<8x32xf32>
    %160 = vector.extract_strided_slice %158 {offsets = [0, 32], sizes = [8, 32], strides = [1, 1]} : vector<8x64xf32> to vector<8x32xf32>
    %cst_71 = arith.constant dense<0.000000e+00> : vector<8x32xf32>
    %161 = tpu.matmul %148, %2, %cst_71 {dimension_numbers = #tpu.dot_dimension_numbers<[1], [0], [0], [1], [0, 0, 1, 1], [], []>} : vector<8x32xf32>, vector<32x32xf32>, vector<8x32xf32> -> vector<8x32xf32>
    %162 = vector.broadcast %5 : vector<1x32xf32> to vector<8x32xf32>
    %163 = arith.addf %161, %162 : vector<8x32xf32>
    %164 = arith.mulf %159, %163 : vector<8x32xf32>
    %165 = arith.addf %151, %164 : vector<8x32xf32>
    %166 = math.tanh %165 : vector<8x32xf32>
    %cst_72 = arith.constant 1.000000e+00 : f32
    %167 = vector.broadcast %cst_72 : f32 to vector<8x32xf32>
    %168 = arith.subf %167, %160 : vector<8x32xf32>
    %169 = arith.mulf %168, %166 : vector<8x32xf32>
    %170 = arith.mulf %160, %148 : vector<8x32xf32>
    %171 = arith.addf %169, %170 : vector<8x32xf32>
    %c48_73 = arith.constant 48 : index
    %c0_74 = arith.constant 0 : index
    %172 = vector.load %arg7[%c48_73, %c0_74] : memref<64x32xf32, #tpu.memory_space<vmem>>, vector<8x32xf32>
    tpu.vector_store %arg7[%c48_73, %c0_74], %171 {strides = array<i32>} : memref<64x32xf32, #tpu.memory_space<vmem>>, vector<8x32xf32>,
    %c56 = arith.constant 56 : index
    %c0_75 = arith.constant 0 : index
    %173 = vector.load %arg6[%c56, %c0_75] : memref<64x96xf32, #tpu.memory_space<vmem>>, vector<8x64xf32>
    %c56_76 = arith.constant 56 : index
    %c64_77 = arith.constant 64 : index
    %174 = vector.load %arg6[%c56_76, %c64_77] : memref<64x96xf32, #tpu.memory_space<vmem>>, vector<8x32xf32>
    %cst_78 = arith.constant dense<0.000000e+00> : vector<8x64xf32>
    %175 = tpu.matmul %171, %1, %cst_78 {dimension_numbers = #tpu.dot_dimension_numbers<[1], [0], [0], [1], [0, 0, 1, 1], [], []>} : vector<8x32xf32>, vector<32x64xf32>, vector<8x64xf32> -> vector<8x64xf32>
    %176 = arith.addf %173, %175 : vector<8x64xf32>
    %177 = arith.negf %176 : vector<8x64xf32>
    %178 = math.exp %177 : vector<8x64xf32>
    %cst_79 = arith.constant 1.000000e+00 : f32
    %179 = vector.broadcast %cst_79 : f32 to vector<8x64xf32>
    %180 = arith.addf %179, %178 : vector<8x64xf32>
    %181 = arith.divf %179, %180 : vector<8x64xf32>
    %182 = vector.extract_strided_slice %181 {offsets = [0, 0], sizes = [8, 32], strides = [1, 1]} : vector<8x64xf32> to vector<8x32xf32>
    %183 = vector.extract_strided_slice %181 {offsets = [0, 32], sizes = [8, 32], strides = [1, 1]} : vector<8x64xf32> to vector<8x32xf32>
    %cst_80 = arith.constant dense<0.000000e+00> : vector<8x32xf32>
    %184 = tpu.matmul %171, %2, %cst_80 {dimension_numbers = #tpu.dot_dimension_numbers<[1], [0], [0], [1], [0, 0, 1, 1], [], []>} : vector<8x32xf32>, vector<32x32xf32>, vector<8x32xf32> -> vector<8x32xf32>
    %185 = vector.broadcast %5 : vector<1x32xf32> to vector<8x32xf32>
    %186 = arith.addf %184, %185 : vector<8x32xf32>
    %187 = arith.mulf %182, %186 : vector<8x32xf32>
    %188 = arith.addf %174, %187 : vector<8x32xf32>
    %189 = math.tanh %188 : vector<8x32xf32>
    %cst_81 = arith.constant 1.000000e+00 : f32
    %190 = vector.broadcast %cst_81 : f32 to vector<8x32xf32>
    %191 = arith.subf %190, %183 : vector<8x32xf32>
    %192 = arith.mulf %191, %189 : vector<8x32xf32>
    %193 = arith.mulf %183, %171 : vector<8x32xf32>
    %194 = arith.addf %192, %193 : vector<8x32xf32>
    %c56_82 = arith.constant 56 : index
    %c0_83 = arith.constant 0 : index
    %195 = vector.load %arg7[%c56_82, %c0_83] : memref<64x32xf32, #tpu.memory_space<vmem>>, vector<8x32xf32>
    tpu.vector_store %arg7[%c56_82, %c0_83], %194 {strides = array<i32>} : memref<64x32xf32, #tpu.memory_space<vmem>>, vector<8x32xf32>,
    %c0_84 = arith.constant 0 : index
    %c0_85 = arith.constant 0 : index
    %196 = vector.load %arg5[%c0_84, %c0_85] : memref<8x32xf32, #tpu.memory_space<vmem>>, vector<8x32xf32>
    tpu.vector_store %arg5[%c0_84, %c0_85], %194 {strides = array<i32>} : memref<8x32xf32, #tpu.memory_space<vmem>>, vector<8x32xf32>,
    %c88 = arith.constant 88 : index
    %c0_86 = arith.constant 0 : index
    %197 = vector.load %arg3[%c88, %c0_86] : memref<168x128xf32, #tpu.memory_space<vmem>>, vector<32x32xf32>
    %c120 = arith.constant 120 : index
    %c0_87 = arith.constant 0 : index
    %198 = vector.load %arg3[%c120, %c0_87] : memref<168x128xf32, #tpu.memory_space<vmem>>, vector<5x32xf32>
    %c128 = arith.constant 128 : index
    %c0_88 = arith.constant 0 : index
    %199 = vector.load %arg3[%c128, %c0_88] : memref<168x128xf32, #tpu.memory_space<vmem>>, vector<32x1xf32>
    %c160 = arith.constant 160 : index
    %c0_89 = arith.constant 0 : index
    %200 = vector.load %arg3[%c160, %c0_89] : memref<168x128xf32, #tpu.memory_space<vmem>>, vector<5x1xf32>
    %c0_90 = arith.constant 0 : index
    %c0_91 = arith.constant 0 : index
    %201 = vector.load %arg7[%c0_90, %c0_91] : memref<64x32xf32, #tpu.memory_space<vmem>>, vector<64x32xf32>
    %cst_92 = arith.constant dense<0.000000e+00> : vector<32x64xf32>
    %202 = tpu.matmul %197, %201, %cst_92 {dimension_numbers = #tpu.dot_dimension_numbers<[1], [1], [0], [0], [0, 0, 1, 0], [], []>} : vector<32x32xf32>, vector<64x32xf32>, vector<32x64xf32> -> vector<32x64xf32>
    %203 = vector.broadcast %199 : vector<32x1xf32> to vector<32x64xf32>
    %204 = arith.addf %202, %203 : vector<32x64xf32>
    %cst_93 = arith.constant 0.000000e+00 : f32
    %205 = vector.broadcast %cst_93 : f32 to vector<32x64xf32>
    %206 = arith.maximumf %204, %205 : vector<32x64xf32>
    %cst_94 = arith.constant dense<0.000000e+00> : vector<5x64xf32>
    %207 = tpu.matmul %198, %206, %cst_94 {dimension_numbers = #tpu.dot_dimension_numbers<[1], [0], [0], [1], [0, 0, 1, 1], [], []>} : vector<5x32xf32>, vector<32x64xf32>, vector<5x64xf32> -> vector<5x64xf32>
    %208 = vector.broadcast %200 : vector<5x1xf32> to vector<5x64xf32>
    %209 = arith.addf %207, %208 : vector<5x64xf32>
    %210 = vector.extract_strided_slice %209 {offsets = [0, 0], sizes = [4, 64], strides = [1, 1]} : vector<5x64xf32> to vector<4x64xf32>
    %211 = vector.extract_strided_slice %209 {offsets = [4, 0], sizes = [1, 64], strides = [1, 1]} : vector<5x64xf32> to vector<1x64xf32>
    %c0_95 = arith.constant 0 : index
    %c0_96 = arith.constant 0 : index
    %212 = vector.load %arg2[%c0_95, %c0_96] : memref<4x64xf32, #tpu.memory_space<vmem>>, vector<4x64xf32>
    %213 = arith.addf %210, %212 : vector<4x64xf32>
    %214 = tpu.iota {dimensions = array<i32: 0>} : vector<4x64xi32>
    %cst_97 = arith.constant dense<0xFF800000> : vector<64xf32>
    %215 = vector.multi_reduction <maximumf>, %213, %cst_97 [0] : vector<4x64xf32> to vector<64xf32>
    %216 = vector.shape_cast %215 : vector<64xf32> to vector<1x64xf32>
    %217 = vector.broadcast %216 : vector<1x64xf32> to vector<4x64xf32>
    %218 = arith.cmpf oge, %213, %217 : vector<4x64xf32>
    %c4_i32 = arith.constant 4 : i32
    %219 = vector.broadcast %c4_i32 : i32 to vector<4x64xi32>
    %220 = arith.select %218, %214, %219 : vector<4x64xi1>, vector<4x64xi32>
    %cst_98 = arith.constant dense<2147483647> : vector<64xi32>
    %221 = vector.multi_reduction <minsi>, %220, %cst_98 [0] : vector<4x64xi32> to vector<64xi32>
    %222 = vector.shape_cast %221 : vector<64xi32> to vector<1x64xi32>
    %cst_99 = arith.constant dense<0xFF800000> : vector<64xf32>
    %223 = vector.multi_reduction <maximumf>, %210, %cst_99 [0] : vector<4x64xf32> to vector<64xf32>
    %224 = vector.shape_cast %223 : vector<64xf32> to vector<1x64xf32>
    %225 = vector.broadcast %224 : vector<1x64xf32> to vector<4x64xf32>
    %226 = arith.subf %210, %225 : vector<4x64xf32>
    %227 = math.exp %226 : vector<4x64xf32>
    %cst_100 = arith.constant dense<0.000000e+00> : vector<64xf32>
    %228 = vector.multi_reduction <add>, %227, %cst_100 [0] : vector<4x64xf32> to vector<64xf32>
    %229 = vector.shape_cast %228 : vector<64xf32> to vector<1x64xf32>
    %230 = math.log %229 : vector<1x64xf32>
    %231 = arith.addf %230, %224 : vector<1x64xf32>
    %232 = vector.broadcast %231 : vector<1x64xf32> to vector<4x64xf32>
    %233 = arith.subf %210, %232 : vector<4x64xf32>
    %234 = vector.broadcast %222 : vector<1x64xi32> to vector<4x64xi32>
    %235 = arith.cmpi eq, %214, %234 : vector<4x64xi32>
    %236 = arith.extui %235 : vector<4x64xi1> to vector<4x64xi32>
    %237 = arith.sitofp %236 : vector<4x64xi32> to vector<4x64xf32>
    %238 = arith.mulf %233, %237 : vector<4x64xf32>
    %cst_101 = arith.constant dense<0.000000e+00> : vector<64xf32>
    %239 = vector.multi_reduction <add>, %238, %cst_101 [0] : vector<4x64xf32> to vector<64xf32>
    %240 = vector.shape_cast %239 : vector<64xf32> to vector<1x64xf32>
    %241 = arith.sitofp %222 : vector<1x64xi32> to vector<1x64xf32>
    %242 = tpu.concatenate %241, %211, %240 in 0 : vector<1x64xf32>, vector<1x64xf32>, vector<1x64xf32> -> vector<3x64xf32>
    %c0_102 = arith.constant 0 : index
    %c0_103 = arith.constant 0 : index
    %243 = vector.load %arg4[%c0_102, %c0_103] : memref<3x64xf32, #tpu.memory_space<vmem>>, vector<3x64xf32>
    tpu.vector_store %arg4[%c0_102, %c0_103], %242 {strides = array<i32>} : memref<3x64xf32, #tpu.memory_space<vmem>>, vector<3x64xf32>,
    return
  }
}

</mosaic_0001>

<llo_original>
// kernel: squeeze.5
$region0: #{squeeze.5}
  %s0 = inlined_call_operand.vmem [shape: f32[64], index: 0, kind: input, shape index: {}]
  %s1 = inlined_call_operand.vmem [shape: f32[8,8], index: 1, kind: output, shape index: {}]
  $region1: #{squeeze.5} parent=0
    #allocation0 [shape = 'u8[4096]{0}', space=vmem, size = 0x1000, scoped, tag = 'scoped mem for input reshape']
    %s3 = ssub.s32 2, 1
    %v4 = vld [vmem:[%s0] sm:%s3]
    %5 = vst [vmem:[#allocation0] sm:%s3] %v4
    %v6 = vld [vmem:[#allocation0] sm:$0x1]
    %vm7 = vcmask 64512
    %8 = vst.msk [vmem:[%s1] sm:$0x1] %vm7, %v6
    %v9 = vld [vmem:[#allocation0] sm:$0x1]
    %10 = vrot.lane.b32.xlu0 %v9, 120
    %v11 = vpop.permute.xlu0 %10
    %vm12 = vcmask 64512
    %s13 = scalar_lea.vmem %s1, 1
    %14 = vst.msk [vmem:[%s13] sm:$0x1] %vm12, %v11
    %v15 = vld [vmem:[#allocation0] sm:$0x1]
    %16 = vrot.lane.b32.xlu0 %v15, 112
    %v17 = vpop.permute.xlu0 %16
    %vm18 = vcmask 64512
    %s19 = scalar_lea.vmem %s1, 2
    %20 = vst.msk [vmem:[%s19] sm:$0x1] %vm18, %v17
    %v21 = vld [vmem:[#allocation0] sm:$0x1]
    %22 = vrot.lane.b32.xlu0 %v21, 104
    %v23 = vpop.permute.xlu0 %22
    %vm24 = vcmask 64512
    %s25 = scalar_lea.vmem %s1, 3
    %26 = vst.msk [vmem:[%s25] sm:$0x1] %vm24, %v23
    %v27 = vld [vmem:[#allocation0] sm:$0x1]
    %28 = vrot.lane.b32.xlu0 %v27, 96
    %v29 = vpop.permute.xlu0 %28
    %vm30 = vcmask 64512
    %s31 = scalar_lea.vmem %s1, 4
    %32 = vst.msk [vmem:[%s31] sm:$0x1] %vm30, %v29
    %v33 = vld [vmem:[#allocation0] sm:$0x1]
    %34 = vrot.lane.b32.xlu0 %v33, 88
    %v35 = vpop.permute.xlu0 %34
    %vm36 = vcmask 64512
    %s37 = scalar_lea.vmem %s1, 5
    %38 = vst.msk [vmem:[%s37] sm:$0x1] %vm36, %v35
    %v39 = vld [vmem:[#allocation0] sm:$0x1]
    %40 = vrot.lane.b32.xlu0 %v39, 80
    %v41 = vpop.permute.xlu0 %40
    %vm42 = vcmask 64512
    %s43 = scalar_lea.vmem %s1, 6
    %44 = vst.msk [vmem:[%s43] sm:$0x1] %vm42, %v41
    %v45 = vld [vmem:[#allocation0] sm:$0x1]
    %46 = vrot.lane.b32.xlu0 %v45, 72
    %v47 = vpop.permute.xlu0 %46
    %vm48 = vcmask 64512
    %s49 = scalar_lea.vmem %s1, 7
    %50 = vst.msk [vmem:[%s49] sm:$0x1] %vm48, %v47

// kernel: gru_policy_forward.1
$region0: #{gru_policy_forward.1}
  #allocation0 [shape = 'u32[]', space=smem, size = 0x4, offset = 0x4, fixed_abs, tag = 'smem constant byte address 0x4 - core index']
  #allocation1 [shape = 'u32[72,128]{1,0:T(1,128)}', space=vmem, size = 0x9000, scoped, tag = 'internal scratch']
  #allocation2 [shape = 'f32[64,96]{1,0:T(8,128)}', space=vmem, size = 0x8000, scoped, tag = 'scratch operand']
  #allocation3 [shape = 'f32[64,32]{1,0:T(8,128)}', space=vmem, size = 0x8000, scoped, tag = 'scratch operand']
  %s0 = inlined_call_operand.vmem [shape: f32[64,16], index: 0, kind: input, shape index: {}]
  %s1 = inlined_call_operand.vmem [shape: f32[8,32], index: 1, kind: input, shape index: {}]
  %s2 = inlined_call_operand.vmem [shape: f32[4,64], index: 2, kind: input, shape index: {}]
  %s3 = inlined_call_operand.vmem [shape: f32[168,128], index: 3, kind: input, shape index: {}]
  %s4 = inlined_call_operand.vmem [shape: f32[3,64], index: 4, kind: output, shape index: {0}]
  %s5 = inlined_call_operand.hbm [shape: f32[8,32], index: 5, kind: output, shape index: {1}]
  %6 = xla_tuple %s4, %s5
  %s7 = sld [smem:[#allocation0]]
  $region34: #{gru_policy_forward.1} parent=0
    _
  %s9 = ssub.s32 1, %s7
  %s10 = scalar_select 0, %s9, %s7
  $region1: #{gru_policy_forward.1} parent=0
    #allocation4 [shape = 'u8[4096]{0}', space=vmem, size = 0x1000, scoped, tag = 'output window, operand 1, single buffered']
    #allocation5 [shape = 's32[1]{0}', space=sflag, size = 0x4, scoped, tag = 'scoped memory for gru_policy_forward.1']
    %11 = vsyncpa [#allocation5], 0
    // Predicated region
    $region2: #{gru_policy_forward.1} parent=1 // pred_check
      _
    $region3: #{gru_policy_forward.1} parent=1 // pred_check_branch
      %13 = sbr.rel (0) target = $region5
    $region4: #{gru_policy_forward.1} parent=1 // pred_region
      _
    $region5: #{gru_policy_forward.1} parent=1 // pred_fallthru
      _
    // Predicated region
    $region6: #{gru_policy_forward.1} parent=1 // pred_check
      _
    $region7: #{gru_policy_forward.1} parent=1 // pred_check_branch
      %15 = sbr.rel (0) target = $region9
    $region8: #{gru_policy_forward.1} parent=1 // pred_region
      _
    $region9: #{gru_policy_forward.1} parent=1 // pred_fallthru
      _
    // Predicated region
    $region10: #{gru_policy_forward.1} parent=1 // pred_check
      _
    $region11: #{gru_policy_forward.1} parent=1 // pred_check_branch
      %17 = sbr.rel (0) target = $region13
    $region12: #{gru_policy_forward.1} parent=1 // pred_region
      _
    $region13: #{gru_policy_forward.1} parent=1 // pred_fallthru
      _
    // Predicated region
    $region14: #{gru_policy_forward.1} parent=1 // pred_check
      _
    $region15: #{gru_policy_forward.1} parent=1 // pred_check_branch
      %19 = sbr.rel (0) target = $region17
    $region16: #{gru_policy_forward.1} parent=1 // pred_region
      _
    $region17: #{gru_policy_forward.1} parent=1 // pred_fallthru
      _
    %v20 = vld [vmem:[%s3] sm:$0xff]
    %v21 = vld [vmem:[%s3 + $0x8] sm:$0xff]
    %v22 = vld [vmem:[%s3 + $0x10] sm:$0xff]
    %v23 = vld [vmem:[%s3 + $0x18] sm:$0xff]
    %v24 = vld [vmem:[%s3 + $0x20] sm:$0xff]
    %v25 = vld [vmem:[%s3 + $0x28] sm:$0xff]
    %v26 = vld [vmem:[%s3 + $0x30] sm:$0xff]
    %v27 = vld [vmem:[%s3 + $0x38] sm:$0xff]
    %v28 = vld [vmem:[%s3 + $0x40] sm:$0xff]
    %v29 = vld [vmem:[%s3 + $0x48] sm:$0xff]
    %v30 = vld [vmem:[%s3 + $0x50] sm:$0x1]
    %v31 = vld [vmem:[%s0] sm:$0xff]
    %v32 = vld [vmem:[%s0 + $0x8] sm:$0xff]
    %v33 = vld [vmem:[%s0 + $0x10] sm:$0xff]
    %v34 = vld [vmem:[%s0 + $0x18] sm:$0xff]
    %v35 = vld [vmem:[%s0 + $0x20] sm:$0xff]
    %v36 = vld [vmem:[%s0 + $0x28] sm:$0xff]
    %v37 = vld [vmem:[%s0 + $0x30] sm:$0xff]
    %v38 = vld [vmem:[%s0 + $0x38] sm:$0xff]
    %v39 = vperm.slane %v30, 0
    %vm40 = vcmask 130048
    %v42 = vsel %vm40, %v31, 0
    %v45 = vsel %vm40, %v32, 0
    %v48 = vsel %vm40, %v33, 0
    %v51 = vsel %vm40, %v34, 0
    %v54 = vsel %vm40, %v35, 0
    %v57 = vsel %vm40, %v36, 0
    %v60 = vsel %vm40, %v37, 0
    %v63 = vsel %vm40, %v38, 0
    %65 = vmatpush.msra.mxu0 0.0
    %66 = vmatpush.msra.mxu0 0.0
    %67 = vmatpush.msra.mxu0 0.0
    %68 = vmatpush.msra.mxu0 0.0
    %69 = vmatpush.msra.mxu0 0.0
    %70 = vmatpush.msra.mxu0 0.0
    %71 = vmatpush.msra.mxu0 0.0
    %72 = vmatpush.msra.mxu0 0.0
    %73 = vmatpush.msra.mxu0 0.0
    %74 = vmatpush.msra.mxu0 0.0
    %75 = vmatpush.msra.mxu0 0.0
    %76 = vmatpush.msra.mxu0 0.0
    %77 = vmatpush.msra.mxu0 0.0
    %78 = vmatpush.msra.mxu0 0.0
    %79 = vmatpush.msra.mxu0 %v21
    %80 = vmatpush.msra.mxu0 %v20
    %81 = vmatmul.f32.gmra.mxu0 %v42
    %v82 = vpop.f32.mrf.mxu0
    %v83 = vadd.f32 %v39, %v82
    %84 = vmatmul.f32.gmra.mxu0 %v45
    %v85 = vpop.f32.mrf.mxu0
    %v86 = vadd.f32 %v39, %v85
    %87 = vmatmul.f32.gmra.mxu0 %v48
    %v88 = vpop.f32.mrf.mxu0
    %v89 = vadd.f32 %v39, %v88
    %90 = vmatmul.f32.gmra.mxu0 %v51
    %v91 = vpop.f32.mrf.mxu0
    %v92 = vadd.f32 %v39, %v91
    %93 = vmatmul.f32.gmra.mxu0 %v54
    %v94 = vpop.f32.mrf.mxu0
    %v95 = vadd.f32 %v39, %v94
    %96 = vmatmul.f32.gmra.mxu0 %v57
    %v97 = vpop.f32.mrf.mxu0
    %v98 = vadd.f32 %v39, %v97
    %99 = vmatmul.f32.gmra.mxu0 %v60
    %v100 = vpop.f32.mrf.mxu0
    %v101 = vadd.f32 %v39, %v100
    %102 = vmatmul.f32.gmra.mxu0 %v63
    %v103 = vpop.f32.mrf.mxu0
    %v104 = vadd.f32 %v39, %v103
    %105 = vdwg.mxu0
    %vm106 = vcmask 785408
    %107 = vst.msk [vmem:[#allocation2] sm:$0xff] %vm106, %v83
    %108 = vst.msk [vmem:[#allocation2 + $0x8] sm:$0xff] %vm106, %v86
    %109 = vst.msk [vmem:[#allocation2 + $0x10] sm:$0xff] %vm106, %v89
    %110 = vst.msk [vmem:[#allocation2 + $0x18] sm:$0xff] %vm106, %v92
    %111 = vst.msk [vmem:[#allocation2 + $0x20] sm:$0xff] %vm106, %v95
    %112 = vst.msk [vmem:[#allocation2 + $0x28] sm:$0xff] %vm106, %v98
    %113 = vst.msk [vmem:[#allocation2 + $0x30] sm:$0xff] %vm106, %v101
    %114 = vst.msk [vmem:[#allocation2 + $0x38] sm:$0xff] %vm106, %v104
    %v115 = vld [vmem:[%s1] sm:$0xff]
    %v116 = vld [vmem:[#allocation2] sm:$0xff]
    %vm117 = vcmask 261120
    %v119 = vsel %vm117, %v115, 0
    %121 = vmatpush.msra.mxu0 0.0
    %122 = vmatpush.msra.mxu0 0.0
    %123 = vmatpush.msra.mxu0 0.0
    %124 = vmatpush.msra.mxu0 0.0
    %125 = vmatpush.msra.mxu0 0.0
    %126 = vmatpush.msra.mxu0 0.0
    %127 = vmatpush.msra.mxu0 0.0
    %128 = vmatpush.msra.mxu0 0.0
    %129 = vmatpush.msra.mxu0 0.0
    %130 = vmatpush.msra.mxu0 0.0
    %131 = vmatpush.msra.mxu0 0.0
    %132 = vmatpush.msra.mxu0 0.0
    %133 = vmatpush.msra.mxu0 %v25
    %134 = vmatpush.msra.mxu0 %v24
    %135 = vmatpush.msra.mxu0 %v23
    %136 = vmatpush.msra.mxu0 %v22
    %137 = vmatmul.f32.gmra.mxu0 %v119
    %v138 = vpop.f32.mrf.mxu0
    %v139 = vadd.f32 0.0, %v138
    %140 = vdwg.mxu0
    %v141 = vadd.f32 %v116, %v139
    %v142 = vxor.u32 %v141, 2147483648
    %v143 = vmul.f32 %v142, 1.442695
    %v144 = vpow.pop %v143
    %v145 = vadd.f32 %v144, 1.0
    %v146 = vrcp.pop %v145
    %v147 = vmul.f32 %v145, %v146
    %v148 = vsub.f32 1.0, %v147
    %v149 = vmul.f32 %v146, %v148
    %v150 = vadd.f32 %v146, %v149
    %vm151 = vweird.f32 %v145
    %vm152 = vweird.f32 %v146
    %vm153 = vmor %vm151, %vm152
    %v154 = vsel %vm153, %v146, %v150
    %v155 = vand.u32 2147483647, %v145
    %vm156 = vcmp.eq.f32.partialorder %v155, 8.507059e+37
    %v157 = vand.u32 %v145, 2147483648
    %v158 = vor.u32 1.1754944e-38, %v157
    %v159 = vsel %vm156, %v158, %v154
    %v160 = vmul.f32 1.0, %v159
    %162 = vrot.lane.b32.xlu0 %v39, 32
    %v163 = vpop.permute.xlu0 %162
    %165 = vmatpush.msra.mxu0 0.0
    %166 = vmatpush.msra.mxu0 0.0
    %167 = vmatpush.msra.mxu0 0.0
    %168 = vmatpush.msra.mxu0 0.0
    %169 = vmatpush.msra.mxu0 0.0
    %170 = vmatpush.msra.mxu0 0.0
    %171 = vmatpush.msra.mxu0 0.0
    %172 = vmatpush.msra.mxu0 0.0
    %173 = vmatpush.msra.mxu0 0.0
    %174 = vmatpush.msra.mxu0 0.0
    %175 = vmatpush.msra.mxu0 0.0
    %176 = vmatpush.msra.mxu0 0.0
    %177 = vmatpush.msra.mxu0 %v29
    %178 = vmatpush.msra.mxu0 %v28
    %179 = vmatpush.msra.mxu0 %v27
    %180 = vmatpush.msra.mxu0 %v26
    %181 = vmatmul.f32.gmra.mxu0 %v119
    %v182 = vpop.f32.mrf.mxu0
    %v183 = vadd.f32 %v163, %v182
    %184 = vdwg.mxu0
    %v185 = vmul.f32 %v160, %v183
    %187 = vrot.lane.b32.xlu0 %v185, 64
    %v188 = vpop.permute.xlu0 %187
    %v190 = vadd.f32 %v116, %v188
    %v191 = vtanh.pop %v190
    %v192 = vsub.f32 1.0, %v160
    %194 = vrot.lane.b32.xlu0 %v191, 96
    %v195 = vpop.permute.xlu0 %194
    %v197 = vmul.f32 %v192, %v195
    %198 = vrot.lane.b32.xlu0 %v115, 32
    %v199 = vpop.permute.xlu0 %198
    %v201 = vmul.f32 %v160, %v199
    %v202 = vadd.f32 %v197, %v201
    %204 = vrot.lane.b32.xlu0 %v202, 96
    %v205 = vpop.permute.xlu0 %204
    %207 = vst.msk [vmem:[#allocation3] sm:$0xff] %vm117, %v205
    %v208 = vld [vmem:[#allocation2 + $0x8] sm:$0xff]
    %v209 = vsel %vm117, %v205, 0
    %211 = vmatpush.msra.mxu0 0.0
    %212 = vmatpush.msra.mxu0 0.0
    %213 = vmatpush.msra.mxu0 0.0
    %214 = vmatpush.msra.mxu0 0.0
    %215 = vmatpush.msra.mxu0 0.0
    %216 = vmatpush.msra.mxu0 0.0
    %217 = vmatpush.msra.mxu0 0.0
    %218 = vmatpush.msra.mxu0 0.0
    %219 = vmatpush.msra.mxu0 0.0
    %220 = vmatpush.msra.mxu0 0.0
    %221 = vmatpush.msra.mxu0 0.0
    %222 = vmatpush.msra.mxu0 0.0
    %223 = vmatpush.msra.mxu0 %v25
    %224 = vmatpush.msra.mxu0 %v24
    %225 = vmatpush.msra.mxu0 %v23
    %226 = vmatpush.msra.mxu0 %v22
    %227 = vmatmul.f32.gmra.mxu0 %v209
    %v228 = vpop.f32.mrf.mxu0
    %v229 = vadd.f32 0.0, %v228
    %230 = vdwg.mxu0
    %v231 = vadd.f32 %v208, %v229
    %v232 = vxor.u32 %v231, 2147483648
    %v233 = vmul.f32 %v232, 1.442695
    %v234 = vpow.pop %v233
    %v235 = vadd.f32 %v234, 1.0
    %v236 = vrcp.pop %v235
    %v237 = vmul.f32 %v235, %v236
    %v238 = vsub.f32 1.0, %v237
    %v239 = vmul.f32 %v236, %v238
    %v240 = vadd.f32 %v236, %v239
    %vm241 = vweird.f32 %v235
    %vm242 = vweird.f32 %v236
    %vm243 = vmor %vm241, %vm242
    %v244 = vsel %vm243, %v236, %v240
    %v245 = vand.u32 2147483647, %v235
    %vm246 = vcmp.eq.f32.partialorder %v245, 8.507059e+37
    %v247 = vand.u32 %v235, 2147483648
    %v248 = vor.u32 1.1754944e-38, %v247
    %v249 = vsel %vm246, %v248, %v244
    %v250 = vmul.f32 1.0, %v249
    %251 = vmatpush.msra.mxu0 0.0
    %252 = vmatpush.msra.mxu0 0.0
    %253 = vmatpush.msra.mxu0 0.0
    %254 = vmatpush.msra.mxu0 0.0
    %255 = vmatpush.msra.mxu0 0.0
    %256 = vmatpush.msra.mxu0 0.0
    %257 = vmatpush.msra.mxu0 0.0
    %258 = vmatpush.msra.mxu0 0.0
    %259 = vmatpush.msra.mxu0 0.0
    %260 = vmatpush.msra.mxu0 0.0
    %261 = vmatpush.msra.mxu0 0.0
    %262 = vmatpush.msra.mxu0 0.0
    %263 = vmatpush.msra.mxu0 %v29
    %264 = vmatpush.msra.mxu0 %v28
    %265 = vmatpush.msra.mxu0 %v27
    %266 = vmatpush.msra.mxu0 %v26
    %267 = vmatmul.f32.gmra.mxu0 %v209
    %v268 = vpop.f32.mrf.mxu0
    %v269 = vadd.f32 %v163, %v268
    %270 = vdwg.mxu0
    %v271 = vmul.f32 %v250, %v269
    %273 = vrot.lane.b32.xlu0 %v271, 64
    %v274 = vpop.permute.xlu0 %273
    %v276 = vadd.f32 %v208, %v274
    %v277 = vtanh.pop %v276
    %v278 = vsub.f32 1.0, %v250
    %280 = vrot.lane.b32.xlu0 %v277, 96
    %v281 = vpop.permute.xlu0 %280
    %v283 = vmul.f32 %v278, %v281
    %v284 = vmul.f32 %v250, %v202
    %v285 = vadd.f32 %v283, %v284
    %287 = vrot.lane.b32.xlu0 %v285, 96
    %v288 = vpop.permute.xlu0 %287
    %290 = vst.msk [vmem:[#allocation3 + $0x8] sm:$0xff] %vm117, %v288
    %v291 = vld [vmem:[#allocation2 + $0x10] sm:$0xff]
    %v292 = vsel %vm117, %v288, 0
    %294 = vmatpush.msra.mxu0 0.0
    %295 = vmatpush.msra.mxu0 0.0
    %296 = vmatpush.msra.mxu0 0.0
    %297 = vmatpush.msra.mxu0 0.0
    %298 = vmatpush.msra.mxu0 0.0
    %299 = vmatpush.msra.mxu0 0.0
    %300 = vmatpush.msra.mxu0 0.0
    %301 = vmatpush.msra.mxu0 0.0
    %302 = vmatpush.msra.mxu0 0.0
    %303 = vmatpush.msra.mxu0 0.0
    %304 = vmatpush.msra.mxu0 0.0
    %305 = vmatpush.msra.mxu0 0.0
    %306 = vmatpush.msra.mxu0 %v25
    %307 = vmatpush.msra.mxu0 %v24
    %308 = vmatpush.msra.mxu0 %v23
    %309 = vmatpush.msra.mxu0 %v22
    %310 = vmatmul.f32.gmra.mxu0 %v292
    %v311 = vpop.f32.mrf.mxu0
    %v312 = vadd.f32 0.0, %v311
    %313 = vdwg.mxu0
    %v314 = vadd.f32 %v291, %v312
    %v315 = vxor.u32 %v314, 2147483648
    %v316 = vmul.f32 %v315, 1.442695
    %v317 = vpow.pop %v316
    %v318 = vadd.f32 %v317, 1.0
    %v319 = vrcp.pop %v318
    %v320 = vmul.f32 %v318, %v319
    %v321 = vsub.f32 1.0, %v320
    %v322 = vmul.f32 %v319, %v321
    %v323 = vadd.f32 %v319, %v322
    %vm324 = vweird.f32 %v318
    %vm325 = vweird.f32 %v319
    %vm326 = vmor %vm324, %vm325
    %v327 = vsel %vm326, %v319, %v323
    %v328 = vand.u32 2147483647, %v318
    %vm329 = vcmp.eq.f32.partialorder %v328, 8.507059e+37
    %v330 = vand.u32 %v318, 2147483648
    %v331 = vor.u32 1.1754944e-38, %v330
    %v332 = vsel %vm329, %v331, %v327
    %v333 = vmul.f32 1.0, %v332
    %334 = vmatpush.msra.mxu0 0.0
    %335 = vmatpush.msra.mxu0 0.0
    %336 = vmatpush.msra.mxu0 0.0
    %337 = vmatpush.msra.mxu0 0.0
    %338 = vmatpush.msra.mxu0 0.0
    %339 = vmatpush.msra.mxu0 0.0
    %340 = vmatpush.msra.mxu0 0.0
    %341 = vmatpush.msra.mxu0 0.0
    %342 = vmatpush.msra.mxu0 0.0
    %343 = vmatpush.msra.mxu0 0.0
    %344 = vmatpush.msra.mxu0 0.0
    %345 = vmatpush.msra.mxu0 0.0
    %346 = vmatpush.msra.mxu0 %v29
    %347 = vmatpush.msra.mxu0 %v28
    %348 = vmatpush.msra.mxu0 %v27
    %349 = vmatpush.msra.mxu0 %v26
    %350 = vmatmul.f32.gmra.mxu0 %v292
    %v351 = vpop.f32.mrf.mxu0
    %v352 = vadd.f32 %v163, %v351
    %353 = vdwg.mxu0
    %v354 = vmul.f32 %v333, %v352
    %356 = vrot.lane.b32.xlu0 %v354, 64
    %v357 = vpop.permute.xlu0 %356
    %v359 = vadd.f32 %v291, %v357
    %v360 = vtanh.pop %v359
    %v361 = vsub.f32 1.0, %v333
    %363 = vrot.lane.b32.xlu0 %v360, 96
    %v364 = vpop.permute.xlu0 %363
    %v366 = vmul.f32 %v361, %v364
    %v367 = vmul.f32 %v333, %v285
    %v368 = vadd.f32 %v366, %v367
    %370 = vrot.lane.b32.xlu0 %v368, 96
    %v371 = vpop.permute.xlu0 %370
    %373 = vst.msk [vmem:[#allocation3 + $0x10] sm:$0xff] %vm117, %v371
    %v374 = vld [vmem:[#allocation2 + $0x18] sm:$0xff]
    %v375 = vsel %vm117, %v371, 0
    %377 = vmatpush.msra.mxu0 0.0
    %378 = vmatpush.msra.mxu0 0.0
    %379 = vmatpush.msra.mxu0 0.0
    %380 = vmatpush.msra.mxu0 0.0
    %381 = vmatpush.msra.mxu0 0.0
    %382 = vmatpush.msra.mxu0 0.0
    %383 = vmatpush.msra.mxu0 0.0
    %384 = vmatpush.msra.mxu0 0.0
    %385 = vmatpush.msra.mxu0 0.0
    %386 = vmatpush.msra.mxu0 0.0
    %387 = vmatpush.msra.mxu0 0.0
    %388 = vmatpush.msra.mxu0 0.0
    %389 = vmatpush.msra.mxu0 %v25
    %390 = vmatpush.msra.mxu0 %v24
    %391 = vmatpush.msra.mxu0 %v23
    %392 = vmatpush.msra.mxu0 %v22
    %393 = vmatmul.f32.gmra.mxu0 %v375
    %v394 = vpop.f32.mrf.mxu0
    %v395 = vadd.f32 0.0, %v394
    %396 = vdwg.mxu0
    %v397 = vadd.f32 %v374, %v395
    %v398 = vxor.u32 %v397, 2147483648
    %v399 = vmul.f32 %v398, 1.442695
    %v400 = vpow.pop %v399
    %v401 = vadd.f32 %v400, 1.0
    %v402 = vrcp.pop %v401
    %v403 = vmul.f32 %v401, %v402
    %v404 = vsub.f32 1.0, %v403
    %v405 = vmul.f32 %v402, %v404
    %v406 = vadd.f32 %v402, %v405
    %vm407 = vweird.f32 %v401
    %vm408 = vweird.f32 %v402
    %vm409 = vmor %vm407, %vm408
    %v410 = vsel %vm409, %v402, %v406
    %v411 = vand.u32 2147483647, %v401
    %vm412 = vcmp.eq.f32.partialorder %v411, 8.507059e+37
    %v413 = vand.u32 %v401, 2147483648
    %v414 = vor.u32 1.1754944e-38, %v413
    %v415 = vsel %vm412, %v414, %v410
    %v416 = vmul.f32 1.0, %v415
    %417 = vmatpush.msra.mxu0 0.0
    %418 = vmatpush.msra.mxu0 0.0
    %419 = vmatpush.msra.mxu0 0.0
    %420 = vmatpush.msra.mxu0 0.0
    %421 = vmatpush.msra.mxu0 0.0
    %422 = vmatpush.msra.mxu0 0.0
    %423 = vmatpush.msra.mxu0 0.0
    %424 = vmatpush.msra.mxu0 0.0
    %425 = vmatpush.msra.mxu0 0.0
    %426 = vmatpush.msra.mxu0 0.0
    %427 = vmatpush.msra.mxu0 0.0
    %428 = vmatpush.msra.mxu0 0.0
    %429 = vmatpush.msra.mxu0 %v29
    %430 = vmatpush.msra.mxu0 %v28
    %431 = vmatpush.msra.mxu0 %v27
    %432 = vmatpush.msra.mxu0 %v26
    %433 = vmatmul.f32.gmra.mxu0 %v375
    %v434 = vpop.f32.mrf.mxu0
    %v435 = vadd.f32 %v163, %v434
    %436 = vdwg.mxu0
    %v437 = vmul.f32 %v416, %v435
    %439 = vrot.lane.b32.xlu0 %v437, 64
    %v440 = vpop.permute.xlu0 %439
    %v442 = vadd.f32 %v374, %v440
    %v443 = vtanh.pop %v442
    %v444 = vsub.f32 1.0, %v416
    %446 = vrot.lane.b32.xlu0 %v443, 96
    %v447 = vpop.permute.xlu0 %446
    %v449 = vmul.f32 %v444, %v447
    %v450 = vmul.f32 %v416, %v368
    %v451 = vadd.f32 %v449, %v450
    %453 = vrot.lane.b32.xlu0 %v451, 96
    %v454 = vpop.permute.xlu0 %453
    %456 = vst.msk [vmem:[#allocation3 + $0x18] sm:$0xff] %vm117, %v454
    %v457 = vld [vmem:[#allocation2 + $0x20] sm:$0xff]
    %v458 = vsel %vm117, %v454, 0
    %460 = vmatpush.msra.mxu0 0.0
    %461 = vmatpush.msra.mxu0 0.0
    %462 = vmatpush.msra.mxu0 0.0
    %463 = vmatpush.msra.mxu0 0.0
    %464 = vmatpush.msra.mxu0 0.0
    %465 = vmatpush.msra.mxu0 0.0
    %466 = vmatpush.msra.mxu0 0.0
    %467 = vmatpush.msra.mxu0 0.0
    %468 = vmatpush.msra.mxu0 0.0
    %469 = vmatpush.msra.mxu0 0.0
    %470 = vmatpush.msra.mxu0 0.0
    %471 = vmatpush.msra.mxu0 0.0
    %472 = vmatpush.msra.mxu0 %v25
    %473 = vmatpush.msra.mxu0 %v24
    %474 = vmatpush.msra.mxu0 %v23
    %475 = vmatpush.msra.mxu0 %v22
    %476 = vmatmul.f32.gmra.mxu0 %v458
    %v477 = vpop.f32.mrf.mxu0
    %v478 = vadd.f32 0.0, %v477
    %479 = vdwg.mxu0
    %v480 = vadd.f32 %v457, %v478
    %v481 = vxor.u32 %v480, 2147483648
    %v482 = vmul.f32 %v481, 1.442695
    %v483 = vpow.pop %v482
    %v484 = vadd.f32 %v483, 1.0
    %v485 = vrcp.pop %v484
    %v486 = vmul.f32 %v484, %v485
    %v487 = vsub.f32 1.0, %v486
    %v488 = vmul.f32 %v485, %v487
    %v489 = vadd.f32 %v485, %v488
    %vm490 = vweird.f32 %v484
    %vm491 = vweird.f32 %v485
    %vm492 = vmor %vm490, %vm491
    %v493 = vsel %vm492, %v485, %v489
    %v494 = vand.u32 2147483647, %v484
    %vm495 = vcmp.eq.f32.partialorder %v494, 8.507059e+37
    %v496 = vand.u32 %v484, 2147483648
    %v497 = vor.u32 1.1754944e-38, %v496
    %v498 = vsel %vm495, %v497, %v493
    %v499 = vmul.f32 1.0, %v498
    %500 = vmatpush.msra.mxu0 0.0
    %501 = vmatpush.msra.mxu0 0.0
    %502 = vmatpush.msra.mxu0 0.0
    %503 = vmatpush.msra.mxu0 0.0
    %504 = vmatpush.msra.mxu0 0.0
    %505 = vmatpush.msra.mxu0 0.0
    %506 = vmatpush.msra.mxu0 0.0
    %507 = vmatpush.msra.mxu0 0.0
    %508 = vmatpush.msra.mxu0 0.0
    %509 = vmatpush.msra.mxu0 0.0
    %510 = vmatpush.msra.mxu0 0.0
    %511 = vmatpush.msra.mxu0 0.0
    %512 = vmatpush.msra.mxu0 %v29
    %513 = vmatpush.msra.mxu0 %v28
    %514 = vmatpush.msra.mxu0 %v27
    %515 = vmatpush.msra.mxu0 %v26
    %516 = vmatmul.f32.gmra.mxu0 %v458
    %v517 = vpop.f32.mrf.mxu0
    %v518 = vadd.f32 %v163, %v517
    %519 = vdwg.mxu0
    %v520 = vmul.f32 %v499, %v518
    %522 = vrot.lane.b32.xlu0 %v520, 64
    %v523 = vpop.permute.xlu0 %522
    %v525 = vadd.f32 %v457, %v523
    %v526 = vtanh.pop %v525
    %v527 = vsub.f32 1.0, %v499
    %529 = vrot.lane.b32.xlu0 %v526, 96
    %v530 = vpop.permute.xlu0 %529
    %v532 = vmul.f32 %v527, %v530
    %v533 = vmul.f32 %v499, %v451
    %v534 = vadd.f32 %v532, %v533
    %536 = vrot.lane.b32.xlu0 %v534, 96
    %v537 = vpop.permute.xlu0 %536
    %539 = vst.msk [vmem:[#allocation3 + $0x20] sm:$0xff] %vm117, %v537
    %v540 = vld [vmem:[#allocation2 + $0x28] sm:$0xff]
    %v541 = vsel %vm117, %v537, 0
    %543 = vmatpush.msra.mxu0 0.0
    %544 = vmatpush.msra.mxu0 0.0
    %545 = vmatpush.msra.mxu0 0.0
    %546 = vmatpush.msra.mxu0 0.0
    %547 = vmatpush.msra.mxu0 0.0
    %548 = vmatpush.msra.mxu0 0.0
    %549 = vmatpush.msra.mxu0 0.0
    %550 = vmatpush.msra.mxu0 0.0
    %551 = vmatpush.msra.mxu0 0.0
    %552 = vmatpush.msra.mxu0 0.0
    %553 = vmatpush.msra.mxu0 0.0
    %554 = vmatpush.msra.mxu0 0.0
    %555 = vmatpush.msra.mxu0 %v25
    %556 = vmatpush.msra.mxu0 %v24
    %557 = vmatpush.msra.mxu0 %v23
    %558 = vmatpush.msra.mxu0 %v22
    %559 = vmatmul.f32.gmra.mxu0 %v541
    %v560 = vpop.f32.mrf.mxu0
    %v561 = vadd.f32 0.0, %v560
    %562 = vdwg.mxu0
    %v563 = vadd.f32 %v540, %v561
    %v564 = vxor.u32 %v563, 2147483648
    %v565 = vmul.f32 %v564, 1.442695
    %v566 = vpow.pop %v565
    %v567 = vadd.f32 %v566, 1.0
    %v568 = vrcp.pop %v567
    %v569 = vmul.f32 %v567, %v568
    %v570 = vsub.f32 1.0, %v569
    %v571 = vmul.f32 %v568, %v570
    %v572 = vadd.f32 %v568, %v571
    %vm573 = vweird.f32 %v567
    %vm574 = vweird.f32 %v568
    %vm575 = vmor %vm573, %vm574
    %v576 = vsel %vm575, %v568, %v572
    %v577 = vand.u32 2147483647, %v567
    %vm578 = vcmp.eq.f32.partialorder %v577, 8.507059e+37
    %v579 = vand.u32 %v567, 2147483648
    %v580 = vor.u32 1.1754944e-38, %v579
    %v581 = vsel %vm578, %v580, %v576
    %v582 = vmul.f32 1.0, %v581
    %583 = vmatpush.msra.mxu0 0.0
    %584 = vmatpush.msra.mxu0 0.0
    %585 = vmatpush.msra.mxu0 0.0
    %586 = vmatpush.msra.mxu0 0.0
    %587 = vmatpush.msra.mxu0 0.0
    %588 = vmatpush.msra.mxu0 0.0
    %589 = vmatpush.msra.mxu0 0.0
    %590 = vmatpush.msra.mxu0 0.0
    %591 = vmatpush.msra.mxu0 0.0
    %592 = vmatpush.msra.mxu0 0.0
    %593 = vmatpush.msra.mxu0 0.0
    %594 = vmatpush.msra.mxu0 0.0
    %595 = vmatpush.msra.mxu0 %v29
    %596 = vmatpush.msra.mxu0 %v28
    %597 = vmatpush.msra.mxu0 %v27
    %598 = vmatpush.msra.mxu0 %v26
    %599 = vmatmul.f32.gmra.mxu0 %v541
    %v600 = vpop.f32.mrf.mxu0
    %v601 = vadd.f32 %v163, %v600
    %602 = vdwg.mxu0
    %v603 = vmul.f32 %v582, %v601
    %605 = vrot.lane.b32.xlu0 %v603, 64
    %v606 = vpop.permute.xlu0 %605
    %v608 = vadd.f32 %v540, %v606
    %v609 = vtanh.pop %v608
    %v610 = vsub.f32 1.0, %v582
    %612 = vrot.lane.b32.xlu0 %v609, 96
    %v613 = vpop.permute.xlu0 %612
    %v615 = vmul.f32 %v610, %v613
    %v616 = vmul.f32 %v582, %v534
    %v617 = vadd.f32 %v615, %v616
    %619 = vrot.lane.b32.xlu0 %v617, 96
    %v620 = vpop.permute.xlu0 %619
    %622 = vst.msk [vmem:[#allocation3 + $0x28] sm:$0xff] %vm117, %v620
    %v623 = vld [vmem:[#allocation2 + $0x30] sm:$0xff]
    %v624 = vsel %vm117, %v620, 0
    %626 = vmatpush.msra.mxu0 0.0
    %627 = vmatpush.msra.mxu0 0.0
    %628 = vmatpush.msra.mxu0 0.0
    %629 = vmatpush.msra.mxu0 0.0
    %630 = vmatpush.msra.mxu0 0.0
    %631 = vmatpush.msra.mxu0 0.0
    %632 = vmatpush.msra.mxu0 0.0
    %633 = vmatpush.msra.mxu0 0.0
    %634 = vmatpush.msra.mxu0 0.0
    %635 = vmatpush.msra.mxu0 0.0
    %636 = vmatpush.msra.mxu0 0.0
    %637 = vmatpush.msra.mxu0 0.0
    %638 = vmatpush.msra.mxu0 %v25
    %639 = vmatpush.msra.mxu0 %v24
    %640 = vmatpush.msra.mxu0 %v23
    %641 = vmatpush.msra.mxu0 %v22
    %642 = vmatmul.f32.gmra.mxu0 %v624
    %v643 = vpop.f32.mrf.mxu0
    %v644 = vadd.f32 0.0, %v643
    %645 = vdwg.mxu0
    %v646 = vadd.f32 %v623, %v644
    %v647 = vxor.u32 %v646, 2147483648
    %v648 = vmul.f32 %v647, 1.442695
    %v649 = vpow.pop %v648
    %v650 = vadd.f32 %v649, 1.0
    %v651 = vrcp.pop %v650
    %v652 = vmul.f32 %v650, %v651
    %v653 = vsub.f32 1.0, %v652
    %v654 = vmul.f32 %v651, %v653
    %v655 = vadd.f32 %v651, %v654
    %vm656 = vweird.f32 %v650
    %vm657 = vweird.f32 %v651
    %vm658 = vmor %vm656, %vm657
    %v659 = vsel %vm658, %v651, %v655
    %v660 = vand.u32 2147483647, %v650
    %vm661 = vcmp.eq.f32.partialorder %v660, 8.507059e+37
    %v662 = vand.u32 %v650, 2147483648
    %v663 = vor.u32 1.1754944e-38, %v662
    %v664 = vsel %vm661, %v663, %v659
    %v665 = vmul.f32 1.0, %v664
    %666 = vmatpush.msra.mxu0 0.0
    %667 = vmatpush.msra.mxu0 0.0
    %668 = vmatpush.msra.mxu0 0.0
    %669 = vmatpush.msra.mxu0 0.0
    %670 = vmatpush.msra.mxu0 0.0
    %671 = vmatpush.msra.mxu0 0.0
    %672 = vmatpush.msra.mxu0 0.0
    %673 = vmatpush.msra.mxu0 0.0
    %674 = vmatpush.msra.mxu0 0.0
    %675 = vmatpush.msra.mxu0 0.0
    %676 = vmatpush.msra.mxu0 0.0
    %677 = vmatpush.msra.mxu0 0.0
    %678 = vmatpush.msra.mxu0 %v29
    %679 = vmatpush.msra.mxu0 %v28
    %680 = vmatpush.msra.mxu0 %v27
    %681 = vmatpush.msra.mxu0 %v26
    %682 = vmatmul.f32.gmra.mxu0 %v624
    %v683 = vpop.f32.mrf.mxu0
    %v684 = vadd.f32 %v163, %v683
    %685 = vdwg.mxu0
    %v686 = vmul.f32 %v665, %v684
    %688 = vrot.lane.b32.xlu0 %v686, 64
    %v689 = vpop.permute.xlu0 %688
    %v691 = vadd.f32 %v623, %v689
    %v692 = vtanh.pop %v691
    %v693 = vsub.f32 1.0, %v665
    %695 = vrot.lane.b32.xlu0 %v692, 96
    %v696 = vpop.permute.xlu0 %695
    %v698 = vmul.f32 %v693, %v696
    %v699 = vmul.f32 %v665, %v617
    %v700 = vadd.f32 %v698, %v699
    %702 = vrot.lane.b32.xlu0 %v700, 96
    %v703 = vpop.permute.xlu0 %702
    %705 = vst.msk [vmem:[#allocation3 + $0x30] sm:$0xff] %vm117, %v703
    %v706 = vld [vmem:[#allocation2 + $0x38] sm:$0xff]
    %v707 = vsel %vm117, %v703, 0
    %709 = vmatpush.msra.mxu0 0.0
    %710 = vmatpush.msra.mxu0 0.0
    %711 = vmatpush.msra.mxu0 0.0
    %712 = vmatpush.msra.mxu0 0.0
    %713 = vmatpush.msra.mxu0 0.0
    %714 = vmatpush.msra.mxu0 0.0
    %715 = vmatpush.msra.mxu0 0.0
    %716 = vmatpush.msra.mxu0 0.0
    %717 = vmatpush.msra.mxu0 0.0
    %718 = vmatpush.msra.mxu0 0.0
    %719 = vmatpush.msra.mxu0 0.0
    %720 = vmatpush.msra.mxu0 0.0
    %721 = vmatpush.msra.mxu0 %v25
    %722 = vmatpush.msra.mxu0 %v24
    %723 = vmatpush.msra.mxu0 %v23
    %724 = vmatpush.msra.mxu0 %v22
    %725 = vmatmul.f32.gmra.mxu0 %v707
    %v726 = vpop.f32.mrf.mxu0
    %v727 = vadd.f32 0.0, %v726
    %728 = vdwg.mxu0
    %v729 = vadd.f32 %v706, %v727
    %v730 = vxor.u32 %v729, 2147483648
    %v731 = vmul.f32 %v730, 1.442695
    %v732 = vpow.pop %v731
    %v733 = vadd.f32 %v732, 1.0
    %v734 = vrcp.pop %v733
    %v735 = vmul.f32 %v733, %v734
    %v736 = vsub.f32 1.0, %v735
    %v737 = vmul.f32 %v734, %v736
    %v738 = vadd.f32 %v734, %v737
    %vm739 = vweird.f32 %v733
    %vm740 = vweird.f32 %v734
    %vm741 = vmor %vm739, %vm740
    %v742 = vsel %vm741, %v734, %v738
    %v743 = vand.u32 2147483647, %v733
    %vm744 = vcmp.eq.f32.partialorder %v743, 8.507059e+37
    %v745 = vand.u32 %v733, 2147483648
    %v746 = vor.u32 1.1754944e-38, %v745
    %v747 = vsel %vm744, %v746, %v742
    %v748 = vmul.f32 1.0, %v747
    %749 = vmatpush.msra.mxu0 0.0
    %750 = vmatpush.msra.mxu0 0.0
    %751 = vmatpush.msra.mxu0 0.0
    %752 = vmatpush.msra.mxu0 0.0
    %753 = vmatpush.msra.mxu0 0.0
    %754 = vmatpush.msra.mxu0 0.0
    %755 = vmatpush.msra.mxu0 0.0
    %756 = vmatpush.msra.mxu0 0.0
    %757 = vmatpush.msra.mxu0 0.0
    %758 = vmatpush.msra.mxu0 0.0
    %759 = vmatpush.msra.mxu0 0.0
    %760 = vmatpush.msra.mxu0 0.0
    %761 = vmatpush.msra.mxu0 %v29
    %762 = vmatpush.msra.mxu0 %v28
    %763 = vmatpush.msra.mxu0 %v27
    %764 = vmatpush.msra.mxu0 %v26
    %765 = vmatmul.f32.gmra.mxu0 %v707
    %v766 = vpop.f32.mrf.mxu0
    %v767 = vadd.f32 %v163, %v766
    %768 = vdwg.mxu0
    %v769 = vmul.f32 %v748, %v767
    %771 = vrot.lane.b32.xlu0 %v769, 64
    %v772 = vpop.permute.xlu0 %771
    %v774 = vadd.f32 %v706, %v772
    %v775 = vtanh.pop %v774
    %v776 = vsub.f32 1.0, %v748
    %778 = vrot.lane.b32.xlu0 %v775, 96
    %v779 = vpop.permute.xlu0 %778
    %v781 = vmul.f32 %v776, %v779
    %v782 = vmul.f32 %v748, %v700
    %v783 = vadd.f32 %v781, %v782
    %785 = vrot.lane.b32.xlu0 %v783, 96
    %v786 = vpop.permute.xlu0 %785
    %788 = vst.msk [vmem:[#allocation3 + $0x38] sm:$0xff] %vm117, %v786
    %789 = vst.msk [vmem:[#allocation4] sm:$0xff] %vm117, %v786
    %v790 = vld [vmem:[%s3 + $0x58] sm:$0xff]
    %v791 = vld [vmem:[%s3 + $0x60] sm:$0xff]
    %v792 = vld [vmem:[%s3 + $0x68] sm:$0xff]
    %v793 = vld [vmem:[%s3 + $0x70] sm:$0xff]
    %v794 = vld [vmem:[%s3 + $0x78] sm:$0x1f]
    %v795 = vld [vmem:[%s3 + $0x80] sm:$0xff]
    %v796 = vld [vmem:[%s3 + $0x88] sm:$0xff]
    %v797 = vld [vmem:[%s3 + $0x90] sm:$0xff]
    %v798 = vld [vmem:[%s3 + $0x98] sm:$0xff]
    %v799 = vld [vmem:[%s3 + $0xa0] sm:$0x1f]
    %v800 = vld [vmem:[#allocation3] sm:$0xff]
    %v801 = vld [vmem:[#allocation3 + $0x8] sm:$0xff]
    %v802 = vld [vmem:[#allocation3 + $0x10] sm:$0xff]
    %v803 = vld [vmem:[#allocation3 + $0x18] sm:$0xff]
    %v804 = vld [vmem:[#allocation3 + $0x20] sm:$0xff]
    %v805 = vld [vmem:[#allocation3 + $0x28] sm:$0xff]
    %v806 = vld [vmem:[#allocation3 + $0x30] sm:$0xff]
    %v807 = vld [vmem:[#allocation3 + $0x38] sm:$0xff]
    %809 = vset.pattern.permute.xlu0 0
    %810 = vperm.xlu0 %809, %v795
    %v811 = vpop.permute.xlu0 %810
    %814 = vset.pattern.permute.xlu0 0
    %815 = vperm.xlu0 %814, %v796
    %v816 = vpop.permute.xlu0 %815
    %819 = vset.pattern.permute.xlu0 0
    %820 = vperm.xlu0 %819, %v797
    %v821 = vpop.permute.xlu0 %820
    %824 = vset.pattern.permute.xlu0 0
    %825 = vperm.xlu0 %824, %v798
    %v826 = vpop.permute.xlu0 %825
    %v829 = vsel %vm117, %v790, 0
    %v832 = vsel %vm117, %v791, 0
    %v835 = vsel %vm117, %v792, 0
    %v838 = vsel %vm117, %v793, 0
    %v841 = vsel %vm117, %v800, 0
    %v844 = vsel %vm117, %v801, 0
    %v847 = vsel %vm117, %v802, 0
    %v850 = vsel %vm117, %v803, 0
    %v853 = vsel %vm117, %v804, 0
    %v856 = vsel %vm117, %v805, 0
    %v859 = vsel %vm117, %v806, 0
    %v862 = vsel %vm117, %v807, 0
    %864 = vmatpush.xpose.msra.mxu0 0.0
    %865 = vmatpush.xpose.msra.mxu0 0.0
    %866 = vmatpush.xpose.msra.mxu0 0.0
    %867 = vmatpush.xpose.msra.mxu0 0.0
    %868 = vmatpush.xpose.msra.mxu0 0.0
    %869 = vmatpush.xpose.msra.mxu0 0.0
    %870 = vmatpush.xpose.msra.mxu0 0.0
    %871 = vmatpush.xpose.msra.mxu0 0.0
    %872 = vmatpush.xpose.msra.mxu0 %v862
    %873 = vmatpush.xpose.msra.mxu0 %v859
    %874 = vmatpush.xpose.msra.mxu0 %v856
    %875 = vmatpush.xpose.msra.mxu0 %v853
    %876 = vmatpush.xpose.msra.mxu0 %v850
    %877 = vmatpush.xpose.msra.mxu0 %v847
    %878 = vmatpush.xpose.msra.mxu0 %v844
    %879 = vmatpush.xpose.msra.mxu0 %v841
    %880 = vmatmul.f32.gmra.mxu0 %v829
    %v881 = vpop.f32.mrf.mxu0
    %v882 = vadd.f32 %v811, %v881
    %883 = vmatmul.f32.gmra.mxu0 %v832
    %v884 = vpop.f32.mrf.mxu0
    %v885 = vadd.f32 %v816, %v884
    %886 = vmatmul.f32.gmra.mxu0 %v835
    %v887 = vpop.f32.mrf.mxu0
    %v888 = vadd.f32 %v821, %v887
    %889 = vmatmul.f32.gmra.mxu0 %v838
    %v890 = vpop.f32.mrf.mxu0
    %v891 = vadd.f32 %v826, %v890
    %892 = vdwg.mxu0
    %v893 = vmax.f32 %v882, 0.0
    %v894 = vmax.f32 %v885, 0.0
    %v895 = vmax.f32 %v888, 0.0
    %v896 = vmax.f32 %v891, 0.0
    %898 = vset.pattern.permute.xlu0 0
    %899 = vperm.xlu0 %898, %v799
    %v900 = vpop.permute.xlu0 %899
    %v903 = vsel %vm117, %v794, 0
    %905 = vmatpush.msra.mxu0 0.0
    %906 = vmatpush.msra.mxu0 0.0
    %907 = vmatpush.msra.mxu0 0.0
    %908 = vmatpush.msra.mxu0 0.0
    %909 = vmatpush.msra.mxu0 0.0
    %910 = vmatpush.msra.mxu0 0.0
    %911 = vmatpush.msra.mxu0 0.0
    %912 = vmatpush.msra.mxu0 0.0
    %913 = vmatpush.msra.mxu0 0.0
    %914 = vmatpush.msra.mxu0 0.0
    %915 = vmatpush.msra.mxu0 0.0
    %916 = vmatpush.msra.mxu0 0.0
    %917 = vmatpush.msra.mxu0 %v896
    %918 = vmatpush.msra.mxu0 %v895
    %919 = vmatpush.msra.mxu0 %v894
    %920 = vmatpush.msra.mxu0 %v893
    %921 = vmatmul.f32.gmra.mxu0 %v903
    %v922 = vpop.f32.mrf.mxu0
    %v923 = vadd.f32 %v900, %v922
    %924 = vdwg.mxu0
    %v925 = vld [vmem:[%s2] sm:$0xf]
    %v926 = vadd.f32 %v923, %v925
    %v927 = vlaneseq
    %v928 = vshrl.u32 %v927, 7
    %vm929 = vcmask 519168
    %v930 = vsel %vm929, %v926, -inf
    %v931 = vrot.slane %v930, 4
    %v932 = vmax.f32 %v930, %v931
    %v933 = vrot.slane %v932, 2
    %v934 = vmax.f32 %v932, %v933
    %v935 = vrot.slane %v934, 1
    %v936 = vmax.f32 %v934, %v935
    %vm937 = vcmp.ge.f32.partialorder %v926, %v936
    %v938 = vsel %vm937, %v928, 4
    %v939 = vsel %vm929, %v938, 2147483647
    %v940 = vrot.slane %v939, 4
    %vm941 = vcmp.lt.s32.totalorder %v939, %v940
    %v942 = vsel %vm941, %v939, %v940
    %v943 = vrot.slane %v942, 2
    %vm944 = vcmp.lt.s32.totalorder %v942, %v943
    %v945 = vsel %vm944, %v942, %v943
    %v946 = vrot.slane %v945, 1
    %vm947 = vcmp.lt.s32.totalorder %v945, %v946
    %v948 = vsel %vm947, %v945, %v946
    %v949 = vsel %vm929, %v923, -inf
    %v950 = vrot.slane %v949, 4
    %v951 = vmax.f32 %v949, %v950
    %v952 = vrot.slane %v951, 2
    %v953 = vmax.f32 %v951, %v952
    %v954 = vrot.slane %v953, 1
    %v955 = vmax.f32 %v953, %v954
    %v956 = vsub.f32 %v923, %v955
    %v957 = vmul.f32 %v956, 1.442695
    %v958 = vpow.pop %v957
    %v959 = vsel %vm929, %v958, 0.0
    %v960 = vrot.slane %v959, 4
    %v961 = vadd.f32 %v959, %v960
    %v962 = vrot.slane %v961, 2
    %v963 = vadd.f32 %v961, %v962
    %v964 = vrot.slane %v963, 1
    %v965 = vadd.f32 %v963, %v964
    %v966 = vlog2.pop %v965
    %v967 = vmul.f32 %v966, 0.6931472
    %v968 = vadd.f32 %v967, %v955
    %v969 = vsub.f32 %v923, %v968
    %vm970 = vcmp.eq.s32.totalorder %v928, %v948
    %v971 = vsel %vm970, 1, 0
    %v972 = vcvt.s32.f32 %v971
    %v973 = vmul.f32 %v969, %v972
    %v974 = vsel %vm929, %v973, 0.0
    %v975 = vrot.slane %v974, 4
    %v976 = vadd.f32 %v974, %v975
    %v977 = vrot.slane %v976, 2
    %v978 = vadd.f32 %v976, %v977
    %v979 = vrot.slane %v978, 1
    %v980 = vadd.f32 %v978, %v979
    %v981 = vcvt.s32.f32 %v948
    %v983 = vrot.slane %v923, 3
    %vm985 = vcmask 1040384
    %v986 = vsel %vm985, %v981, %v983
    %vm987 = vcmask 1041408
    %v988 = vsel %vm987, %v986, %v980
    %vm989 = vcmask 518144
    %990 = vst.msk [vmem:[%s4] sm:$0x7] %vm989, %v988
    // Predicated region
    $region18: #{gru_policy_forward.1} parent=1 // pred_check
      _
    $region19: #{gru_policy_forward.1} parent=1 // pred_check_branch
      %992 = sbr.rel (0) target = $region21
    $region20: #{gru_policy_forward.1} parent=1 // pred_region
      _
    $region21: #{gru_policy_forward.1} parent=1 // pred_fallthru
      _
    // Predicated region
    $region22: #{gru_policy_forward.1} parent=1 // pred_check
      _
    $region23: #{gru_policy_forward.1} parent=1 // pred_check_branch
      %994 = sbr.rel (0) target = $region25
    $region24: #{gru_policy_forward.1} parent=1 // pred_region
      %996 = vsyncadd [#allocation5], 0
      %s998 = sshll.u32 [#allocation4], 4
      %s999 = int_to_ptr.vmem [resolvable:$true] %s998
      %s1000 = sshll.u32 %s5, 4
      %s1001 = int_to_ptr.hbm [resolvable:$true] %s1000
      %1003 = dma.vmem_to_hbm [thread:$0]  %s999, 128, %s1001, [#allocation5]
    $region25: #{gru_policy_forward.1} parent=1 // pred_fallthru
      _
    // Predicated region
    $region26: #{gru_policy_forward.1} parent=1 // pred_check
      _
    $region27: #{gru_policy_forward.1} parent=1 // pred_check_branch
      %1005 = sbr.rel (0) target = $region29
    $region28: #{gru_policy_forward.1} parent=1 // pred_region
      _
    $region29: #{gru_policy_forward.1} parent=1 // pred_fallthru
      _
    // Predicated region
    $region30: #{gru_policy_forward.1} parent=1 // pred_check
      _
    $region31: #{gru_policy_forward.1} parent=1 // pred_check_branch
      %1007 = sbr.rel (0) target = $region33
    $region32: #{gru_policy_forward.1} parent=1 // pred_region
      %1009 = dma.done [#allocation5], 128
    $region33: #{gru_policy_forward.1} parent=1 // pred_fallthru
      _
    %1010 = vsyncpa [#allocation5], 1

</llo_original>
